<compile_context>
chip_gen: v6e
topology: v6e:2x2x1
jax: 0.10.0
libtpu: 0.0.40
codegen_flags: <defaults>
</compile_context>

<pallas_src>
import functools

import jax
import jax.numpy as jnp
from jax.experimental import pallas as pl
from jax.experimental.pallas import tpu as pltpu

HIDDEN = 128
SEQ = 4
OUT = 62
OUT_PAD = 64                   # per-timestep lane pad (62 -> 64)
PACK = 2                       # timesteps packed per 128 output lanes
OUT_LANES = PACK * OUT_PAD     # 128
N_PAIRS = SEQ // PACK          # 2
SLAB = N_PAIRS * OUT_LANES     # 256 lanes per output row
GATES = 4 * HIDDEN             # i, f, g, o


def _round_up(n, m):
    return ((n + m - 1) // m) * m


def _sigmoid_via_tanh(x):
    # sigmoid(x) == 0.5 * (tanh(0.5 * x) + 1): single EUP transcendental.
    return 0.5 * (jnp.tanh(0.5 * x) + 1.0)


def decoder_kernel(x_ref, w_ih_ref, w_hh_ref, b_ref, w_out_ref, b_out_ref,
                   out_ref, *, bf16_gates):
    # x_ref:     (bt, 128)   f32 or bf16
    # w_ih_ref:  (128, 512)  bf16  (transposed PyTorch weight_ih_l0, gates i,f,g,o)
    # w_hh_ref:  (128, 512)  bf16  (transposed PyTorch weight_hh_l0)
    # b_ref:     (1, 512)    f32   (bias_ih_l0 + bias_hh_l0)
    # w_out_ref: (256, 128)  bf16  block-diagonal packed Linear weight:
    #            [:128, :62]   = w_out.T      (even timestep of a pair)
    #            [128:, 64:126]= w_out.T      (odd  timestep of a pair)
    # b_out_ref: (1, 128)    f32   packed bias [b_out|0|b_out|0]
    # out_ref:   (bt, 256)   bf16  row layout [y_t0(64)|y_t1(64)|y_t2(64)|y_t3(64)]
    x = x_ref[...]
    bt = x.shape[0]

    # Hoist all weight / bias loads out of the unrolled recurrence.
    w_ih = w_ih_ref[...]
    w_hh = w_hh_ref[...]
    w_out = w_out_ref[...]
    b = b_ref[...]
    b_out = b_out_ref[...]

    # Input projection is identical at every timestep (expand(-1, 4, 128)):
    # compute it once and reuse (one MXU matmul instead of four).
    xg = jnp.dot(x.astype(jnp.bfloat16), w_ih,
                 preferred_element_type=jnp.float32) + b

    c = jnp.zeros((bt, HIDDEN), jnp.float32)
    h_bf = None                       # bf16 hidden state (MXU / projection operand)
    hs = []

    for t in range(SEQ):              # static unrolled length-4 recurrence
        if t == 0:
            gates = xg                # h == 0: recurrent matmul is zero
        else:
            gates = xg + jnp.dot(h_bf, w_hh, preferred_element_type=jnp.float32)

        if bf16_gates:
            # v6e/v7x: bf16 EUP/VPU paths for the transcendentals and gate math;
            # c accumulator stays f32 so drift stays at bf16 level.
            g16 = gates.astype(jnp.bfloat16)
            i_g = _sigmoid_via_tanh(g16[:, 0 * HIDDEN:1 * HIDDEN])
            f_g = _sigmoid_via_tanh(g16[:, 1 * HIDDEN:2 * HIDDEN])
            g_g = jnp.tanh(g16[:, 2 * HIDDEN:3 * HIDDEN])
            o_g = _sigmoid_via_tanh(g16[:, 3 * HIDDEN:4 * HIDDEN])
            c = f_g * c + i_g * g_g                       # promotes to f32
            h_bf = o_g * jnp.tanh(c.astype(jnp.bfloat16))  # bf16
        else:
            # v5e: no bf16 VPU/EUP -- keep gate math in f32.
            i_g = _sigmoid_via_tanh(gates[:, 0 * HIDDEN:1 * HIDDEN])
            f_g = _sigmoid_via_tanh(gates[:, 1 * HIDDEN:2 * HIDDEN])
            g_g = jnp.tanh(gates[:, 2 * HIDDEN:3 * HIDDEN])
            o_g = _sigmoid_via_tanh(gates[:, 3 * HIDDEN:4 * HIDDEN])
            c = f_g * c + i_g * g_g
            h_bf = (o_g * jnp.tanh(c)).astype(jnp.bfloat16)

        hs.append(h_bf)

    # Packed output projection: for each timestep pair, one (bt,256)x(256,128)
    # block-diagonal matmul emits [y_even(64)|y_odd(64)] -> 128-aligned,
    # unmasked bf16 stores into the (bt, 256) output slab.
    for p in range(N_PAIRS):
        h_cat = jnp.concatenate([hs[2 * p], hs[2 * p + 1]], axis=1)   # (bt,256) bf16
        y = jnp.dot(h_cat, w_out, preferred_element_type=jnp.float32) + b_out
        out_ref[:, p * OUT_LANES:(p + 1) * OUT_LANES] = y.astype(out_ref.dtype)


def _use_bf16_gate_math():
    # bf16 VPU/EUP paths exist on v6e/v7x but not v5e -> keep f32 gate math there.
    try:
        kind = jax.devices()[0].device_kind.lower()
    except Exception:
        return True
    return "v5" not in kind


def decoder_forward_packed(x, params, *, bt=512):
    """Hot-path entry point.

    x: any shape flattening to (B, 128), f32 or bf16.
    Returns (packed, B) where packed is a (B_pad, 256) bf16 slab with row layout
    [y_t0(64)|y_t1(64)|y_t2(64)|y_t3(64)] (each y_t padded 62->64).  Perf-
    sensitive consumers should slice/fuse from this slab directly instead of
    paying an extra HBM pass to materialize (B, 4, 62).
    """
    x2 = x.reshape(-1, HIDDEN)
    if x2.dtype != jnp.bfloat16 and x2.dtype != jnp.float32:
        x2 = x2.astype(jnp.float32)
    B = x2.shape[0]
    w_ih_t, w_hh_t, b_sum, w_out_packed, b_out_packed = params

    # Remainder-aware tiling: derive the tile from ceil(B / n_tiles) rounded to
    # 8 sublanes, so awkward batch sizes pad by at most 7 rows per tile.
    n_tiles = max(1, -(-B // bt))
    if n_tiles == 1 and B >= 512:
        n_tiles = 2            # keep >= 2 grid steps for v7x's two TensorCores
    bt_eff = _round_up(-(-B // n_tiles), 8)
    B_pad = bt_eff * n_tiles
    if B_pad != B:
        x2 = jnp.pad(x2, ((0, B_pad - B), (0, 0)))

    kernel = functools.partial(decoder_kernel, bf16_gates=_use_bf16_gate_math())

    packed = pl.pallas_call(
        kernel,
        out_shape=jax.ShapeDtypeStruct((B_pad, SLAB), jnp.bfloat16),
        grid_spec=pltpu.PrefetchScalarGridSpec(
            num_scalar_prefetch=0,
            grid=(n_tiles,),
            in_specs=[
                pl.BlockSpec((bt_eff, HIDDEN), lambda i: (i, 0)),
                pl.BlockSpec((HIDDEN, GATES), lambda i: (0, 0)),
                pl.BlockSpec((HIDDEN, GATES), lambda i: (0, 0)),
                pl.BlockSpec((1, GATES), lambda i: (0, 0)),
                pl.BlockSpec((2 * HIDDEN, OUT_LANES), lambda i: (0, 0)),
                pl.BlockSpec((1, OUT_LANES), lambda i: (0, 0)),
            ],
            out_specs=pl.BlockSpec((bt_eff, SLAB), lambda i: (i, 0)),
        ),
        compiler_params=pltpu.CompilerParams(
            dimension_semantics=("parallel",)),
    )(x2, w_ih_t, w_hh_t, b_sum, w_out_packed, b_out_packed)
    return packed, B


def decoder_forward(x, params, *, bt=512):
    """Module-faithful API: returns (B, 4, 62) float32 (pays one unpack pass)."""
    packed, B = decoder_forward_packed(x, params, bt=bt)
    return packed[:B].astype(jnp.float32).reshape(B, SEQ, OUT_PAD)[..., :OUT]


def init_params(key):
    """Deterministic init matching PyTorch parameter shapes (gate order i,f,g,o)."""
    k = jax.random.split(key, 6)
    s = 1.0 / jnp.sqrt(jnp.float32(HIDDEN))
    w_ih = jax.random.uniform(k[0], (4 * HIDDEN, HIDDEN), jnp.float32, -s, s)
    w_hh = jax.random.uniform(k[1], (4 * HIDDEN, HIDDEN), jnp.float32, -s, s)
    b_ih = jax.random.uniform(k[2], (4 * HIDDEN,), jnp.float32, -s, s)
    b_hh = jax.random.uniform(k[3], (4 * HIDDEN,), jnp.float32, -s, s)
    w_out = jax.random.uniform(k[4], (OUT, HIDDEN), jnp.float32, -s, s)
    b_out = jax.random.uniform(k[5], (OUT,), jnp.float32, -s, s)

    # Glue (outside the kernel): pre-transpose, fuse LSTM biases, pre-cast MXU
    # operands to bf16, and build the block-diagonal packed Linear weight so the
    # kernel can emit two 64-padded timesteps per 128-lane store.
    w_out_packed = jnp.zeros((2 * HIDDEN, OUT_LANES), jnp.float32)
    w_out_packed = w_out_packed.at[:HIDDEN, :OUT].set(w_out.T)
    w_out_packed = w_out_packed.at[HIDDEN:, OUT_PAD:OUT_PAD + OUT].set(w_out.T)
    b_out_packed = jnp.zeros((1, OUT_LANES), jnp.float32)
    b_out_packed = b_out_packed.at[:, :OUT].set(b_out)
    b_out_packed = b_out_packed.at[:, OUT_PAD:OUT_PAD + OUT].set(b_out)

    return (w_ih.T.astype(jnp.bfloat16),
            w_hh.T.astype(jnp.bfloat16),
            (b_ih + b_hh).reshape(1, -1),
            w_out_packed.astype(jnp.bfloat16),
            b_out_packed)


def decoder_ref(x, params):
    """Pure-JAX f32 reference matching PyTorch nn.LSTM + nn.Linear."""
    w_ih_t, w_hh_t, b_sum, w_out_packed, b_out_packed = params
    w_ih_t = w_ih_t.astype(jnp.float32)
    w_hh_t = w_hh_t.astype(jnp.float32)
    w_out_t = w_out_packed.astype(jnp.float32)[:HIDDEN, :OUT]
    b_out = b_out_packed[:, :OUT]
    x2 = x.reshape(-1, HIDDEN).astype(jnp.float32)
    B = x2.shape[0]
    h = jnp.zeros((B, HIDDEN), jnp.float32)
    c = jnp.zeros((B, HIDDEN), jnp.float32)
    xg = x2 @ w_ih_t + b_sum
    outs = []
    for _ in range(SEQ):
        g = xg + h @ w_hh_t
        i = jax.nn.sigmoid(g[:, :HIDDEN])
        f = jax.nn.sigmoid(g[:, HIDDEN:2 * HIDDEN])
        gg = jnp.tanh(g[:, 2 * HIDDEN:3 * HIDDEN])
        o = jax.nn.sigmoid(g[:, 3 * HIDDEN:])
        c = f * c + i * gg
        h = o * jnp.tanh(c)
        outs.append(h @ w_out_t + b_out)
    return jnp.stack(outs, axis=1)


if __name__ == "__main__":
    key = jax.random.PRNGKey(0)
    kx, kp = jax.random.split(key)

    # Small input consistent with the module: any shape flattening to (B, 128).
    x = jax.random.normal(kx, (16, 4, HIDDEN), dtype=jnp.float32)   # B = 64
    params = init_params(kp)

    out = decoder_forward(x, params)
    out = jax.block_until_ready(out)
    assert out.shape == (64, SEQ, OUT), out.shape

    ref = decoder_ref(x, params)
    err = float(jnp.max(jnp.abs(out - ref)))
    # bf16 MXU operands + bf16 gate math + bf16 output storage drift slightly
    # vs the f32 reference over the 4-step recurrence.
    assert err < 1e-1, f"mismatch vs JAX reference: max abs err {err}"

    print("KERNEL_OK")
</pallas_src>

<mosaic_0001>
module attributes {stable_mosaic.version = 11 : i64} {
  func.func @decoder_kernel(%arg0: i32, %arg1: memref<64x128xf32, #tpu.memory_space<vmem>>, %arg2: memref<128x512xbf16, #tpu.memory_space<vmem>>, %arg3: memref<128x512xbf16, #tpu.memory_space<vmem>>, %arg4: memref<1x512xf32, #tpu.memory_space<vmem>>, %arg5: memref<256x128xbf16, #tpu.memory_space<vmem>>, %arg6: memref<1x128xf32, #tpu.memory_space<vmem>>, %arg7: memref<64x256xbf16, #tpu.memory_space<vmem>>) attributes {dimension_semantics = [#tpu.dimension_semantics<parallel>], iteration_bounds = array<i64: 1>, scalar_prefetch = 0 : i64, scratch_operands = 0 : i64, tpu.core_type = #tpu.core_type<tc>, window_params = [{transform_indices = @transform_0, window_bounds = array<i64: 64, 128>}, {pipeline_mode = #tpu.pipeline_mode<synchronous>, transform_indices = @transform_1, window_bounds = array<i64: 128, 512>}, {pipeline_mode = #tpu.pipeline_mode<synchronous>, transform_indices = @transform_2, window_bounds = array<i64: 128, 512>}, {pipeline_mode = #tpu.pipeline_mode<synchronous>, transform_indices = @transform_3, window_bounds = array<i64: 1, 512>}, {pipeline_mode = #tpu.pipeline_mode<synchronous>, transform_indices = @transform_4, window_bounds = array<i64: 256, 128>}, {pipeline_mode = #tpu.pipeline_mode<synchronous>, transform_indices = @transform_5, window_bounds = array<i64: 1, 128>}, {transform_indices = @transform_6, window_bounds = array<i64: 64, 256>}]} {
    %c0 = arith.constant 0 : index
    %c0_0 = arith.constant 0 : index
    %0 = vector.load %arg1[%c0, %c0_0] : memref<64x128xf32, #tpu.memory_space<vmem>>, vector<64x128xf32>
    %c0_1 = arith.constant 0 : index
    %c0_2 = arith.constant 0 : index
    %1 = vector.load %arg2[%c0_1, %c0_2] : memref<128x512xbf16, #tpu.memory_space<vmem>>, vector<128x512xbf16>
    %c0_3 = arith.constant 0 : index
    %c0_4 = arith.constant 0 : index
    %2 = vector.load %arg3[%c0_3, %c0_4] : memref<128x512xbf16, #tpu.memory_space<vmem>>, vector<128x512xbf16>
    %c0_5 = arith.constant 0 : index
    %c0_6 = arith.constant 0 : index
    %3 = vector.load %arg5[%c0_5, %c0_6] : memref<256x128xbf16, #tpu.memory_space<vmem>>, vector<256x128xbf16>
    %c0_7 = arith.constant 0 : index
    %c0_8 = arith.constant 0 : index
    %4 = vector.load %arg4[%c0_7, %c0_8] : memref<1x512xf32, #tpu.memory_space<vmem>>, vector<1x512xf32>
    %c0_9 = arith.constant 0 : index
    %c0_10 = arith.constant 0 : index
    %5 = vector.load %arg6[%c0_9, %c0_10] : memref<1x128xf32, #tpu.memory_space<vmem>>, vector<1x128xf32>
    %6 = arith.truncf %0 : vector<64x128xf32> to vector<64x128xbf16>
    %cst = arith.constant dense<0.000000e+00> : vector<64x512xf32>
    %7 = tpu.matmul %6, %1, %cst {dimension_numbers = #tpu.dot_dimension_numbers<[1], [0], [0], [1], [0, 0, 1, 1], [], []>} : vector<64x128xbf16>, vector<128x512xbf16>, vector<64x512xf32> -> vector<64x512xf32>
    %8 = vector.broadcast %4 : vector<1x512xf32> to vector<64x512xf32>
    %9 = arith.addf %7, %8 : vector<64x512xf32>
    %cst_11 = arith.constant 0.000000e+00 : f32
    %10 = vector.broadcast %cst_11 : f32 to vector<64x128xf32>
    %11 = arith.truncf %9 : vector<64x512xf32> to vector<64x512xbf16>
    %12 = vector.extract_strided_slice %11 {offsets = [0, 0], sizes = [64, 128], strides = [1, 1]} : vector<64x512xbf16> to vector<64x128xbf16>
    %cst_12 = arith.constant 5.000000e-01 : bf16
    %13 = vector.broadcast %cst_12 : bf16 to vector<64x128xbf16>
    %14 = arith.mulf %13, %12 : vector<64x128xbf16>
    %15 = math.tanh %14 : vector<64x128xbf16>
    %cst_13 = arith.constant 1.000000e+00 : bf16
    %16 = vector.broadcast %cst_13 : bf16 to vector<64x128xbf16>
    %17 = arith.addf %15, %16 : vector<64x128xbf16>
    %cst_14 = arith.constant 5.000000e-01 : bf16
    %18 = vector.broadcast %cst_14 : bf16 to vector<64x128xbf16>
    %19 = arith.mulf %18, %17 : vector<64x128xbf16>
    %20 = vector.extract_strided_slice %11 {offsets = [0, 128], sizes = [64, 128], strides = [1, 1]} : vector<64x512xbf16> to vector<64x128xbf16>
    %cst_15 = arith.constant 5.000000e-01 : bf16
    %21 = vector.broadcast %cst_15 : bf16 to vector<64x128xbf16>
    %22 = arith.mulf %21, %20 : vector<64x128xbf16>
    %23 = math.tanh %22 : vector<64x128xbf16>
    %cst_16 = arith.constant 1.000000e+00 : bf16
    %24 = vector.broadcast %cst_16 : bf16 to vector<64x128xbf16>
    %25 = arith.addf %23, %24 : vector<64x128xbf16>
    %cst_17 = arith.constant 5.000000e-01 : bf16
    %26 = vector.broadcast %cst_17 : bf16 to vector<64x128xbf16>
    %27 = arith.mulf %26, %25 : vector<64x128xbf16>
    %28 = vector.extract_strided_slice %11 {offsets = [0, 256], sizes = [64, 128], strides = [1, 1]} : vector<64x512xbf16> to vector<64x128xbf16>
    %29 = math.tanh %28 : vector<64x128xbf16>
    %30 = vector.extract_strided_slice %11 {offsets = [0, 384], sizes = [64, 128], strides = [1, 1]} : vector<64x512xbf16> to vector<64x128xbf16>
    %cst_18 = arith.constant 5.000000e-01 : bf16
    %31 = vector.broadcast %cst_18 : bf16 to vector<64x128xbf16>
    %32 = arith.mulf %31, %30 : vector<64x128xbf16>
    %33 = math.tanh %32 : vector<64x128xbf16>
    %cst_19 = arith.constant 1.000000e+00 : bf16
    %34 = vector.broadcast %cst_19 : bf16 to vector<64x128xbf16>
    %35 = arith.addf %33, %34 : vector<64x128xbf16>
    %cst_20 = arith.constant 5.000000e-01 : bf16
    %36 = vector.broadcast %cst_20 : bf16 to vector<64x128xbf16>
    %37 = arith.mulf %36, %35 : vector<64x128xbf16>
    %38 = arith.extf %27 : vector<64x128xbf16> to vector<64x128xf32>
    %39 = arith.mulf %38, %10 : vector<64x128xf32>
    %40 = arith.mulf %19, %29 : vector<64x128xbf16>
    %41 = arith.extf %40 : vector<64x128xbf16> to vector<64x128xf32>
    %42 = arith.addf %39, %41 : vector<64x128xf32>
    %43 = arith.truncf %42 : vector<64x128xf32> to vector<64x128xbf16>
    %44 = math.tanh %43 : vector<64x128xbf16>
    %45 = arith.mulf %37, %44 : vector<64x128xbf16>
    %cst_21 = arith.constant dense<0.000000e+00> : vector<64x512xf32>
    %46 = tpu.matmul %45, %2, %cst_21 {dimension_numbers = #tpu.dot_dimension_numbers<[1], [0], [0], [1], [0, 0, 1, 1], [], []>} : vector<64x128xbf16>, vector<128x512xbf16>, vector<64x512xf32> -> vector<64x512xf32>
    %47 = arith.addf %9, %46 : vector<64x512xf32>
    %48 = arith.truncf %47 : vector<64x512xf32> to vector<64x512xbf16>
    %49 = vector.extract_strided_slice %48 {offsets = [0, 0], sizes = [64, 128], strides = [1, 1]} : vector<64x512xbf16> to vector<64x128xbf16>
    %cst_22 = arith.constant 5.000000e-01 : bf16
    %50 = vector.broadcast %cst_22 : bf16 to vector<64x128xbf16>
    %51 = arith.mulf %50, %49 : vector<64x128xbf16>
    %52 = math.tanh %51 : vector<64x128xbf16>
    %cst_23 = arith.constant 1.000000e+00 : bf16
    %53 = vector.broadcast %cst_23 : bf16 to vector<64x128xbf16>
    %54 = arith.addf %52, %53 : vector<64x128xbf16>
    %cst_24 = arith.constant 5.000000e-01 : bf16
    %55 = vector.broadcast %cst_24 : bf16 to vector<64x128xbf16>
    %56 = arith.mulf %55, %54 : vector<64x128xbf16>
    %57 = vector.extract_strided_slice %48 {offsets = [0, 128], sizes = [64, 128], strides = [1, 1]} : vector<64x512xbf16> to vector<64x128xbf16>
    %cst_25 = arith.constant 5.000000e-01 : bf16
    %58 = vector.broadcast %cst_25 : bf16 to vector<64x128xbf16>
    %59 = arith.mulf %58, %57 : vector<64x128xbf16>
    %60 = math.tanh %59 : vector<64x128xbf16>
    %cst_26 = arith.constant 1.000000e+00 : bf16
    %61 = vector.broadcast %cst_26 : bf16 to vector<64x128xbf16>
    %62 = arith.addf %60, %61 : vector<64x128xbf16>
    %cst_27 = arith.constant 5.000000e-01 : bf16
    %63 = vector.broadcast %cst_27 : bf16 to vector<64x128xbf16>
    %64 = arith.mulf %63, %62 : vector<64x128xbf16>
    %65 = vector.extract_strided_slice %48 {offsets = [0, 256], sizes = [64, 128], strides = [1, 1]} : vector<64x512xbf16> to vector<64x128xbf16>
    %66 = math.tanh %65 : vector<64x128xbf16>
    %67 = vector.extract_strided_slice %48 {offsets = [0, 384], sizes = [64, 128], strides = [1, 1]} : vector<64x512xbf16> to vector<64x128xbf16>
    %cst_28 = arith.constant 5.000000e-01 : bf16
    %68 = vector.broadcast %cst_28 : bf16 to vector<64x128xbf16>
    %69 = arith.mulf %68, %67 : vector<64x128xbf16>
    %70 = math.tanh %69 : vector<64x128xbf16>
    %cst_29 = arith.constant 1.000000e+00 : bf16
    %71 = vector.broadcast %cst_29 : bf16 to vector<64x128xbf16>
    %72 = arith.addf %70, %71 : vector<64x128xbf16>
    %cst_30 = arith.constant 5.000000e-01 : bf16
    %73 = vector.broadcast %cst_30 : bf16 to vector<64x128xbf16>
    %74 = arith.mulf %73, %72 : vector<64x128xbf16>
    %75 = arith.extf %64 : vector<64x128xbf16> to vector<64x128xf32>
    %76 = arith.mulf %75, %42 : vector<64x128xf32>
    %77 = arith.mulf %56, %66 : vector<64x128xbf16>
    %78 = arith.extf %77 : vector<64x128xbf16> to vector<64x128xf32>
    %79 = arith.addf %76, %78 : vector<64x128xf32>
    %80 = arith.truncf %79 : vector<64x128xf32> to vector<64x128xbf16>
    %81 = math.tanh %80 : vector<64x128xbf16>
    %82 = arith.mulf %74, %81 : vector<64x128xbf16>
    %cst_31 = arith.constant dense<0.000000e+00> : vector<64x512xf32>
    %83 = tpu.matmul %82, %2, %cst_31 {dimension_numbers = #tpu.dot_dimension_numbers<[1], [0], [0], [1], [0, 0, 1, 1], [], []>} : vector<64x128xbf16>, vector<128x512xbf16>, vector<64x512xf32> -> vector<64x512xf32>
    %84 = arith.addf %9, %83 : vector<64x512xf32>
    %85 = arith.truncf %84 : vector<64x512xf32> to vector<64x512xbf16>
    %86 = vector.extract_strided_slice %85 {offsets = [0, 0], sizes = [64, 128], strides = [1, 1]} : vector<64x512xbf16> to vector<64x128xbf16>
    %cst_32 = arith.constant 5.000000e-01 : bf16
    %87 = vector.broadcast %cst_32 : bf16 to vector<64x128xbf16>
    %88 = arith.mulf %87, %86 : vector<64x128xbf16>
    %89 = math.tanh %88 : vector<64x128xbf16>
    %cst_33 = arith.constant 1.000000e+00 : bf16
    %90 = vector.broadcast %cst_33 : bf16 to vector<64x128xbf16>
    %91 = arith.addf %89, %90 : vector<64x128xbf16>
    %cst_34 = arith.constant 5.000000e-01 : bf16
    %92 = vector.broadcast %cst_34 : bf16 to vector<64x128xbf16>
    %93 = arith.mulf %92, %91 : vector<64x128xbf16>
    %94 = vector.extract_strided_slice %85 {offsets = [0, 128], sizes = [64, 128], strides = [1, 1]} : vector<64x512xbf16> to vector<64x128xbf16>
    %cst_35 = arith.constant 5.000000e-01 : bf16
    %95 = vector.broadcast %cst_35 : bf16 to vector<64x128xbf16>
    %96 = arith.mulf %95, %94 : vector<64x128xbf16>
    %97 = math.tanh %96 : vector<64x128xbf16>
    %cst_36 = arith.constant 1.000000e+00 : bf16
    %98 = vector.broadcast %cst_36 : bf16 to vector<64x128xbf16>
    %99 = arith.addf %97, %98 : vector<64x128xbf16>
    %cst_37 = arith.constant 5.000000e-01 : bf16
    %100 = vector.broadcast %cst_37 : bf16 to vector<64x128xbf16>
    %101 = arith.mulf %100, %99 : vector<64x128xbf16>
    %102 = vector.extract_strided_slice %85 {offsets = [0, 256], sizes = [64, 128], strides = [1, 1]} : vector<64x512xbf16> to vector<64x128xbf16>
    %103 = math.tanh %102 : vector<64x128xbf16>
    %104 = vector.extract_strided_slice %85 {offsets = [0, 384], sizes = [64, 128], strides = [1, 1]} : vector<64x512xbf16> to vector<64x128xbf16>
    %cst_38 = arith.constant 5.000000e-01 : bf16
    %105 = vector.broadcast %cst_38 : bf16 to vector<64x128xbf16>
    %106 = arith.mulf %105, %104 : vector<64x128xbf16>
    %107 = math.tanh %106 : vector<64x128xbf16>
    %cst_39 = arith.constant 1.000000e+00 : bf16
    %108 = vector.broadcast %cst_39 : bf16 to vector<64x128xbf16>
    %109 = arith.addf %107, %108 : vector<64x128xbf16>
    %cst_40 = arith.constant 5.000000e-01 : bf16
    %110 = vector.broadcast %cst_40 : bf16 to vector<64x128xbf16>
    %111 = arith.mulf %110, %109 : vector<64x128xbf16>
    %112 = arith.extf %101 : vector<64x128xbf16> to vector<64x128xf32>
    %113 = arith.mulf %112, %79 : vector<64x128xf32>
    %114 = arith.mulf %93, %103 : vector<64x128xbf16>
    %115 = arith.extf %114 : vector<64x128xbf16> to vector<64x128xf32>
    %116 = arith.addf %113, %115 : vector<64x128xf32>
    %117 = arith.truncf %116 : vector<64x128xf32> to vector<64x128xbf16>
    %118 = math.tanh %117 : vector<64x128xbf16>
    %119 = arith.mulf %111, %118 : vector<64x128xbf16>
    %cst_41 = arith.constant dense<0.000000e+00> : vector<64x512xf32>
    %120 = tpu.matmul %119, %2, %cst_41 {dimension_numbers = #tpu.dot_dimension_numbers<[1], [0], [0], [1], [0, 0, 1, 1], [], []>} : vector<64x128xbf16>, vector<128x512xbf16>, vector<64x512xf32> -> vector<64x512xf32>
    %121 = arith.addf %9, %120 : vector<64x512xf32>
    %122 = arith.truncf %121 : vector<64x512xf32> to vector<64x512xbf16>
    %123 = vector.extract_strided_slice %122 {offsets = [0, 0], sizes = [64, 128], strides = [1, 1]} : vector<64x512xbf16> to vector<64x128xbf16>
    %cst_42 = arith.constant 5.000000e-01 : bf16
    %124 = vector.broadcast %cst_42 : bf16 to vector<64x128xbf16>
    %125 = arith.mulf %124, %123 : vector<64x128xbf16>
    %126 = math.tanh %125 : vector<64x128xbf16>
    %cst_43 = arith.constant 1.000000e+00 : bf16
    %127 = vector.broadcast %cst_43 : bf16 to vector<64x128xbf16>
    %128 = arith.addf %126, %127 : vector<64x128xbf16>
    %cst_44 = arith.constant 5.000000e-01 : bf16
    %129 = vector.broadcast %cst_44 : bf16 to vector<64x128xbf16>
    %130 = arith.mulf %129, %128 : vector<64x128xbf16>
    %131 = vector.extract_strided_slice %122 {offsets = [0, 128], sizes = [64, 128], strides = [1, 1]} : vector<64x512xbf16> to vector<64x128xbf16>
    %cst_45 = arith.constant 5.000000e-01 : bf16
    %132 = vector.broadcast %cst_45 : bf16 to vector<64x128xbf16>
    %133 = arith.mulf %132, %131 : vector<64x128xbf16>
    %134 = math.tanh %133 : vector<64x128xbf16>
    %cst_46 = arith.constant 1.000000e+00 : bf16
    %135 = vector.broadcast %cst_46 : bf16 to vector<64x128xbf16>
    %136 = arith.addf %134, %135 : vector<64x128xbf16>
    %cst_47 = arith.constant 5.000000e-01 : bf16
    %137 = vector.broadcast %cst_47 : bf16 to vector<64x128xbf16>
    %138 = arith.mulf %137, %136 : vector<64x128xbf16>
    %139 = vector.extract_strided_slice %122 {offsets = [0, 256], sizes = [64, 128], strides = [1, 1]} : vector<64x512xbf16> to vector<64x128xbf16>
    %140 = math.tanh %139 : vector<64x128xbf16>
    %141 = vector.extract_strided_slice %122 {offsets = [0, 384], sizes = [64, 128], strides = [1, 1]} : vector<64x512xbf16> to vector<64x128xbf16>
    %cst_48 = arith.constant 5.000000e-01 : bf16
    %142 = vector.broadcast %cst_48 : bf16 to vector<64x128xbf16>
    %143 = arith.mulf %142, %141 : vector<64x128xbf16>
    %144 = math.tanh %143 : vector<64x128xbf16>
    %cst_49 = arith.constant 1.000000e+00 : bf16
    %145 = vector.broadcast %cst_49 : bf16 to vector<64x128xbf16>
    %146 = arith.addf %144, %145 : vector<64x128xbf16>
    %cst_50 = arith.constant 5.000000e-01 : bf16
    %147 = vector.broadcast %cst_50 : bf16 to vector<64x128xbf16>
    %148 = arith.mulf %147, %146 : vector<64x128xbf16>
    %149 = arith.extf %138 : vector<64x128xbf16> to vector<64x128xf32>
    %150 = arith.mulf %149, %116 : vector<64x128xf32>
    %151 = arith.mulf %130, %140 : vector<64x128xbf16>
    %152 = arith.extf %151 : vector<64x128xbf16> to vector<64x128xf32>
    %153 = arith.addf %150, %152 : vector<64x128xf32>
    %154 = arith.truncf %153 : vector<64x128xf32> to vector<64x128xbf16>
    %155 = math.tanh %154 : vector<64x128xbf16>
    %156 = arith.mulf %148, %155 : vector<64x128xbf16>
    %157 = tpu.concatenate %45, %82 in 1 : vector<64x128xbf16>, vector<64x128xbf16> -> vector<64x256xbf16>
    %cst_51 = arith.constant dense<0.000000e+00> : vector<64x128xf32>
    %158 = tpu.matmul %157, %3, %cst_51 {dimension_numbers = #tpu.dot_dimension_numbers<[1], [0], [0], [1], [0, 0, 1, 1], [], []>} : vector<64x256xbf16>, vector<256x128xbf16>, vector<64x128xf32> -> vector<64x128xf32>
    %159 = vector.broadcast %5 : vector<1x128xf32> to vector<64x128xf32>
    %160 = arith.addf %158, %159 : vector<64x128xf32>
    %161 = arith.truncf %160 : vector<64x128xf32> to vector<64x128xbf16>
    %c0_52 = arith.constant 0 : index
    %c0_53 = arith.constant 0 : index
    %162 = vector.load %arg7[%c0_52, %c0_53] : memref<64x256xbf16, #tpu.memory_space<vmem>>, vector<64x128xbf16>
    tpu.vector_store %arg7[%c0_52, %c0_53], %161 {strides = array<i32>} : memref<64x256xbf16, #tpu.memory_space<vmem>>, vector<64x128xbf16>,
    %163 = tpu.concatenate %119, %156 in 1 : vector<64x128xbf16>, vector<64x128xbf16> -> vector<64x256xbf16>
    %cst_54 = arith.constant dense<0.000000e+00> : vector<64x128xf32>
    %164 = tpu.matmul %163, %3, %cst_54 {dimension_numbers = #tpu.dot_dimension_numbers<[1], [0], [0], [1], [0, 0, 1, 1], [], []>} : vector<64x256xbf16>, vector<256x128xbf16>, vector<64x128xf32> -> vector<64x128xf32>
    %165 = vector.broadcast %5 : vector<1x128xf32> to vector<64x128xf32>
    %166 = arith.addf %164, %165 : vector<64x128xf32>
    %167 = arith.truncf %166 : vector<64x128xf32> to vector<64x128xbf16>
    %c0_55 = arith.constant 0 : index
    %c128 = arith.constant 128 : index
    %168 = vector.load %arg7[%c0_55, %c128] : memref<64x256xbf16, #tpu.memory_space<vmem>>, vector<64x128xbf16>
    tpu.vector_store %arg7[%c0_55, %c128], %167 {strides = array<i32>} : memref<64x256xbf16, #tpu.memory_space<vmem>>, vector<64x128xbf16>,
    return
  }
  func.func @transform_0(%arg0: i32) -> (i32, i32) {
    %c0_i32 = arith.constant 0 : i32
    %c0_i32_0 = arith.constant 0 : i32
    return %arg0, %c0_i32 : i32, i32
  }
  func.func @transform_1(%arg0: i32) -> (i32, i32) {
    %c0_i32 = arith.constant 0 : i32
    %c0_i32_0 = arith.constant 0 : i32
    %c0_i32_1 = arith.constant 0 : i32
    return %c0_i32, %c0_i32_0 : i32, i32
  }
  func.func @transform_2(%arg0: i32) -> (i32, i32) {
    %c0_i32 = arith.constant 0 : i32
    %c0_i32_0 = arith.constant 0 : i32
    %c0_i32_1 = arith.constant 0 : i32
    return %c0_i32, %c0_i32_0 : i32, i32
  }
  func.func @transform_3(%arg0: i32) -> (i32, i32) {
    %c0_i32 = arith.constant 0 : i32
    %c0_i32_0 = arith.constant 0 : i32
    %c0_i32_1 = arith.constant 0 : i32
    return %c0_i32, %c0_i32_0 : i32, i32
  }
  func.func @transform_4(%arg0: i32) -> (i32, i32) {
    %c0_i32 = arith.constant 0 : i32
    %c0_i32_0 = arith.constant 0 : i32
    %c0_i32_1 = arith.constant 0 : i32
    return %c0_i32, %c0_i32_0 : i32, i32
  }
  func.func @transform_5(%arg0: i32) -> (i32, i32) {
    %c0_i32 = arith.constant 0 : i32
    %c0_i32_0 = arith.constant 0 : i32
    %c0_i32_1 = arith.constant 0 : i32
    return %c0_i32, %c0_i32_0 : i32, i32
  }
  func.func @transform_6(%arg0: i32) -> (i32, i32) {
    %c0_i32 = arith.constant 0 : i32
    %c0_i32_0 = arith.constant 0 : i32
    return %arg0, %c0_i32 : i32, i32
  }
}

</mosaic_0001>

<llo_original>
// kernel: tpu_custom_call.1
$region0: #{tpu_custom_call.1}
  #allocation0 [shape = 'u32[]', space=smem, size = 0x4, offset = 0x4, fixed_abs, tag = 'smem constant byte address 0x4 - core index']
  #allocation1 [shape = 'u32[144,128]{1,0:T(1,128)}', space=vmem, size = 0x12000, scoped, tag = 'internal scratch']
  %s0 = inlined_call_operand.hbm [shape: f32[64,128], index: 0, kind: input, shape index: {}]
  %s1 = inlined_call_operand.hbm [shape: bf16[128,512], index: 1, kind: input, shape index: {}]
  %s2 = inlined_call_operand.hbm [shape: bf16[128,512], index: 2, kind: input, shape index: {}]
  %s3 = inlined_call_operand.vmem [shape: f32[1,512], index: 3, kind: input, shape index: {}]
  %s4 = inlined_call_operand.hbm [shape: bf16[256,128], index: 4, kind: input, shape index: {}]
  %s5 = inlined_call_operand.vmem [shape: f32[1,128], index: 5, kind: input, shape index: {}]
  %s6 = inlined_call_operand.hbm [shape: bf16[64,256], index: 6, kind: output, shape index: {}]
  %s7 = sld [smem:[#allocation0]]
  $region50: #{tpu_custom_call.1} parent=0
    _
  %s9 = ssub.s32 1, %s7
  %s10 = scalar_select 0, %s9, %s7
  $region1: #{tpu_custom_call.1} parent=0
    #allocation2 [shape = 'u8[32768]{0}', space=vmem, size = 0x8000, scoped, tag = 'input window, operand 0, single buffered']
    #allocation3 [shape = 's32[1]{0}', space=sflag, size = 0x4, scoped, tag = 'scoped memory for tpu_custom_call.1']
    #allocation4 [shape = 's32[1]{0}', space=sflag, size = 0x4, scoped, tag = 'scoped memory for tpu_custom_call.1']
    #allocation5 [shape = 'u8[131072]{0}', space=vmem, size = 0x20000, scoped, tag = 'input window, operand 1, single buffered']
    #allocation6 [shape = 's32[1]{0}', space=sflag, size = 0x4, scoped, tag = 'scoped memory for tpu_custom_call.1']
    #allocation7 [shape = 'u8[131072]{0}', space=vmem, size = 0x20000, scoped, tag = 'input window, operand 2, single buffered']
    #allocation8 [shape = 'u8[65536]{0}', space=vmem, size = 0x10000, scoped, tag = 'input window, operand 4, single buffered']
    #allocation9 [shape = 's32[1]{0}', space=sflag, size = 0x4, scoped, tag = 'scoped memory for tpu_custom_call.1']
    #allocation10 [shape = 'u8[32768]{0}', space=vmem, size = 0x8000, scoped, tag = 'output window, operand 0, single buffered']
    %11 = vsyncpa [#allocation3], 0
    %12 = vsyncpa [#allocation6], 0
    %13 = vsyncpa [#allocation9], 0
    %14 = vsyncpa [#allocation4], 0
    // Predicated region
    $region2: #{tpu_custom_call.1} parent=1 // pred_check
      _
    $region3: #{tpu_custom_call.1} parent=1 // pred_check_branch
      %16 = sbr.rel (0) target = $region5
    $region4: #{tpu_custom_call.1} parent=1 // pred_region
      %s18 = ssub.s32 1024, 1024
      %19 = vsyncadd [#allocation3], %s18
      %s20 = sshll.u32 [#allocation2], 4
      %s21 = int_to_ptr.vmem [resolvable:$true] %s20
      %26 = dma.hbm_to_vmem [thread:$0]  %s0, 1024, %s21, [#allocation3], 128, 128, 8
    $region5: #{tpu_custom_call.1} parent=1 // pred_fallthru
      _
    // Predicated region
    $region6: #{tpu_custom_call.1} parent=1 // pred_check
      _
    $region7: #{tpu_custom_call.1} parent=1 // pred_check_branch
      %28 = sbr.rel (0) target = $region9
    $region8: #{tpu_custom_call.1} parent=1 // pred_region
      %s30 = ssub.s32 4096, 4096
      %31 = vsyncadd [#allocation6], %s30
      %s32 = sshll.u32 [#allocation5], 4
      %s33 = int_to_ptr.vmem [resolvable:$true] %s32
      %38 = dma.hbm_to_vmem [thread:$0]  %s1, 4096, %s33, [#allocation6], 256, 256, 16
    $region9: #{tpu_custom_call.1} parent=1 // pred_fallthru
      _
    // Predicated region
    $region10: #{tpu_custom_call.1} parent=1 // pred_check
      _
    $region11: #{tpu_custom_call.1} parent=1 // pred_check_branch
      %40 = sbr.rel (0) target = $region13
    $region12: #{tpu_custom_call.1} parent=1 // pred_region
      %s42 = ssub.s32 4096, 4096
      %43 = vsyncadd [#allocation6], %s42
      %s44 = sshll.u32 [#allocation7], 4
      %s45 = int_to_ptr.vmem [resolvable:$true] %s44
      %50 = dma.hbm_to_vmem [thread:$0]  %s2, 4096, %s45, [#allocation6], 256, 256, 16
    $region13: #{tpu_custom_call.1} parent=1 // pred_fallthru
      _
    // Predicated region
    $region14: #{tpu_custom_call.1} parent=1 // pred_check
      _
    $region15: #{tpu_custom_call.1} parent=1 // pred_check_branch
      %52 = sbr.rel (0) target = $region17
    $region16: #{tpu_custom_call.1} parent=1 // pred_region
      _
    $region17: #{tpu_custom_call.1} parent=1 // pred_fallthru
      _
    // Predicated region
    $region18: #{tpu_custom_call.1} parent=1 // pred_check
      _
    $region19: #{tpu_custom_call.1} parent=1 // pred_check_branch
      %54 = sbr.rel (0) target = $region21
    $region20: #{tpu_custom_call.1} parent=1 // pred_region
      %s56 = ssub.s32 2048, 2048
      %57 = vsyncadd [#allocation9], %s56
      %s58 = sshll.u32 [#allocation8], 4
      %s59 = int_to_ptr.vmem [resolvable:$true] %s58
      %64 = dma.hbm_to_vmem [thread:$0]  %s4, 2048, %s59, [#allocation9], 64, 64, 4
    $region21: #{tpu_custom_call.1} parent=1 // pred_fallthru
      _
    // Predicated region
    $region22: #{tpu_custom_call.1} parent=1 // pred_check
      _
    $region23: #{tpu_custom_call.1} parent=1 // pred_check_branch
      %66 = sbr.rel (0) target = $region25
    $region24: #{tpu_custom_call.1} parent=1 // pred_region
      _
    $region25: #{tpu_custom_call.1} parent=1 // pred_fallthru
      _
    // Predicated region
    $region26: #{tpu_custom_call.1} parent=1 // pred_check
      _
    $region27: #{tpu_custom_call.1} parent=1 // pred_check_branch
      %68 = sbr.rel (0) target = $region29
    $region28: #{tpu_custom_call.1} parent=1 // pred_region
      %69 = dma.done [#allocation3], 1024
    $region29: #{tpu_custom_call.1} parent=1 // pred_fallthru
      _
    // Predicated region
    $region30: #{tpu_custom_call.1} parent=1 // pred_check
      _
    $region31: #{tpu_custom_call.1} parent=1 // pred_check_branch
      %71 = sbr.rel (0) target = $region33
    $region32: #{tpu_custom_call.1} parent=1 // pred_region
      %72 = dma.done [#allocation6], 4096
    $region33: #{tpu_custom_call.1} parent=1 // pred_fallthru
      _
    // Predicated region
    $region34: #{tpu_custom_call.1} parent=1 // pred_check
      _
    $region35: #{tpu_custom_call.1} parent=1 // pred_check_branch
      %74 = sbr.rel (0) target = $region37
    $region36: #{tpu_custom_call.1} parent=1 // pred_region
      %75 = dma.done [#allocation6], 4096
    $region37: #{tpu_custom_call.1} parent=1 // pred_fallthru
      _
    // Predicated region
    $region38: #{tpu_custom_call.1} parent=1 // pred_check
      _
    $region39: #{tpu_custom_call.1} parent=1 // pred_check_branch
      %77 = sbr.rel (0) target = $region41
    $region40: #{tpu_custom_call.1} parent=1 // pred_region
      %78 = dma.done [#allocation9], 2048
    $region41: #{tpu_custom_call.1} parent=1 // pred_fallthru
      _
    %v82 = vld [vmem:[#allocation2] sm:$0xff]
    %v83 = vld [vmem:[#allocation2 + $0x8] sm:$0xff]
    %v84 = vld [vmem:[#allocation2 + $0x10] sm:$0xff]
    %v85 = vld [vmem:[#allocation2 + $0x18] sm:$0xff]
    %v86 = vld [vmem:[#allocation2 + $0x20] sm:$0xff]
    %v87 = vld [vmem:[#allocation2 + $0x28] sm:$0xff]
    %v88 = vld [vmem:[#allocation2 + $0x30] sm:$0xff]
    %v89 = vld [vmem:[#allocation2 + $0x38] sm:$0xff]
    %v90 = vld [vmem:[#allocation5] sm:$0xff]
    %v91 = vld [vmem:[#allocation5 + $0x8] sm:$0xff]
    %v92 = vld [vmem:[#allocation5 + $0x10] sm:$0xff]
    %v93 = vld [vmem:[#allocation5 + $0x18] sm:$0xff]
    %v94 = vld [vmem:[#allocation5 + $0x20] sm:$0xff]
    %v95 = vld [vmem:[#allocation5 + $0x28] sm:$0xff]
    %v96 = vld [vmem:[#allocation5 + $0x30] sm:$0xff]
    %v97 = vld [vmem:[#allocation5 + $0x38] sm:$0xff]
    %v98 = vld [vmem:[#allocation5 + $0x40] sm:$0xff]
    %v99 = vld [vmem:[#allocation5 + $0x48] sm:$0xff]
    %v100 = vld [vmem:[#allocation5 + $0x50] sm:$0xff]
    %v101 = vld [vmem:[#allocation5 + $0x58] sm:$0xff]
    %v102 = vld [vmem:[#allocation5 + $0x60] sm:$0xff]
    %v103 = vld [vmem:[#allocation5 + $0x68] sm:$0xff]
    %v104 = vld [vmem:[#allocation5 + $0x70] sm:$0xff]
    %v105 = vld [vmem:[#allocation5 + $0x78] sm:$0xff]
    %v106 = vld [vmem:[#allocation5 + $0x80] sm:$0xff]
    %v107 = vld [vmem:[#allocation5 + $0x88] sm:$0xff]
    %v108 = vld [vmem:[#allocation5 + $0x90] sm:$0xff]
    %v109 = vld [vmem:[#allocation5 + $0x98] sm:$0xff]
    %v110 = vld [vmem:[#allocation5 + $0xa0] sm:$0xff]
    %v111 = vld [vmem:[#allocation5 + $0xa8] sm:$0xff]
    %v112 = vld [vmem:[#allocation5 + $0xb0] sm:$0xff]
    %v113 = vld [vmem:[#allocation5 + $0xb8] sm:$0xff]
    %v114 = vld [vmem:[#allocation5 + $0xc0] sm:$0xff]
    %v115 = vld [vmem:[#allocation5 + $0xc8] sm:$0xff]
    %v116 = vld [vmem:[#allocation5 + $0xd0] sm:$0xff]
    %v117 = vld [vmem:[#allocation5 + $0xd8] sm:$0xff]
    %v118 = vld [vmem:[#allocation5 + $0xe0] sm:$0xff]
    %v119 = vld [vmem:[#allocation5 + $0xe8] sm:$0xff]
    %v120 = vld [vmem:[#allocation5 + $0xf0] sm:$0xff]
    %v121 = vld [vmem:[#allocation5 + $0xf8] sm:$0xff]
    %v122 = vld [vmem:[#allocation7] sm:$0xff]
    %v123 = vld [vmem:[#allocation7 + $0x8] sm:$0xff]
    %v124 = vld [vmem:[#allocation7 + $0x10] sm:$0xff]
    %v125 = vld [vmem:[#allocation7 + $0x18] sm:$0xff]
    %v126 = vld [vmem:[#allocation7 + $0x20] sm:$0xff]
    %v127 = vld [vmem:[#allocation7 + $0x28] sm:$0xff]
    %v128 = vld [vmem:[#allocation7 + $0x30] sm:$0xff]
    %v129 = vld [vmem:[#allocation7 + $0x38] sm:$0xff]
    %v130 = vld [vmem:[#allocation7 + $0x40] sm:$0xff]
    %v131 = vld [vmem:[#allocation7 + $0x48] sm:$0xff]
    %v132 = vld [vmem:[#allocation7 + $0x50] sm:$0xff]
    %v133 = vld [vmem:[#allocation7 + $0x58] sm:$0xff]
    %v134 = vld [vmem:[#allocation7 + $0x60] sm:$0xff]
    %v135 = vld [vmem:[#allocation7 + $0x68] sm:$0xff]
    %v136 = vld [vmem:[#allocation7 + $0x70] sm:$0xff]
    %v137 = vld [vmem:[#allocation7 + $0x78] sm:$0xff]
    %v138 = vld [vmem:[#allocation7 + $0x80] sm:$0xff]
    %v139 = vld [vmem:[#allocation7 + $0x88] sm:$0xff]
    %v140 = vld [vmem:[#allocation7 + $0x90] sm:$0xff]
    %v141 = vld [vmem:[#allocation7 + $0x98] sm:$0xff]
    %v142 = vld [vmem:[#allocation7 + $0xa0] sm:$0xff]
    %v143 = vld [vmem:[#allocation7 + $0xa8] sm:$0xff]
    %v144 = vld [vmem:[#allocation7 + $0xb0] sm:$0xff]
    %v145 = vld [vmem:[#allocation7 + $0xb8] sm:$0xff]
    %v146 = vld [vmem:[#allocation7 + $0xc0] sm:$0xff]
    %v147 = vld [vmem:[#allocation7 + $0xc8] sm:$0xff]
    %v148 = vld [vmem:[#allocation7 + $0xd0] sm:$0xff]
    %v149 = vld [vmem:[#allocation7 + $0xd8] sm:$0xff]
    %v150 = vld [vmem:[#allocation7 + $0xe0] sm:$0xff]
    %v151 = vld [vmem:[#allocation7 + $0xe8] sm:$0xff]
    %v152 = vld [vmem:[#allocation7 + $0xf0] sm:$0xff]
    %v153 = vld [vmem:[#allocation7 + $0xf8] sm:$0xff]
    %v154 = vld [vmem:[#allocation8] sm:$0xf]
    %v155 = vld [vmem:[#allocation8 + $0x4] sm:$0xf]
    %v156 = vld [vmem:[#allocation8 + $0x8] sm:$0xf]
    %v157 = vld [vmem:[#allocation8 + $0xc] sm:$0xf]
    %v158 = vld [vmem:[#allocation8 + $0x10] sm:$0xf]
    %v159 = vld [vmem:[#allocation8 + $0x14] sm:$0xf]
    %v160 = vld [vmem:[#allocation8 + $0x18] sm:$0xf]
    %v161 = vld [vmem:[#allocation8 + $0x1c] sm:$0xf]
    %v162 = vld [vmem:[#allocation8 + $0x20] sm:$0xf]
    %v163 = vld [vmem:[#allocation8 + $0x24] sm:$0xf]
    %v164 = vld [vmem:[#allocation8 + $0x28] sm:$0xf]
    %v165 = vld [vmem:[#allocation8 + $0x2c] sm:$0xf]
    %v166 = vld [vmem:[#allocation8 + $0x30] sm:$0xf]
    %v167 = vld [vmem:[#allocation8 + $0x34] sm:$0xf]
    %v168 = vld [vmem:[#allocation8 + $0x38] sm:$0xf]
    %v169 = vld [vmem:[#allocation8 + $0x3c] sm:$0xf]
    %v170 = vld [vmem:[#allocation8 + $0x40] sm:$0xf]
    %v171 = vld [vmem:[#allocation8 + $0x44] sm:$0xf]
    %v172 = vld [vmem:[#allocation8 + $0x48] sm:$0xf]
    %v173 = vld [vmem:[#allocation8 + $0x4c] sm:$0xf]
    %v174 = vld [vmem:[#allocation8 + $0x50] sm:$0xf]
    %v175 = vld [vmem:[#allocation8 + $0x54] sm:$0xf]
    %v176 = vld [vmem:[#allocation8 + $0x58] sm:$0xf]
    %v177 = vld [vmem:[#allocation8 + $0x5c] sm:$0xf]
    %v178 = vld [vmem:[#allocation8 + $0x60] sm:$0xf]
    %v179 = vld [vmem:[#allocation8 + $0x64] sm:$0xf]
    %v180 = vld [vmem:[#allocation8 + $0x68] sm:$0xf]
    %v181 = vld [vmem:[#allocation8 + $0x6c] sm:$0xf]
    %v182 = vld [vmem:[#allocation8 + $0x70] sm:$0xf]
    %v183 = vld [vmem:[#allocation8 + $0x74] sm:$0xf]
    %v184 = vld [vmem:[#allocation8 + $0x78] sm:$0xf]
    %v185 = vld [vmem:[#allocation8 + $0x7c] sm:$0xf]
    %v186 = vld [vmem:[%s3] sm:$0xf]
    %v187 = vld [vmem:[%s5] sm:$0x1]
    %v188 = vpack.c.bf16 %v83, %v82
    %v189 = vpack.c.bf16 %v85, %v84
    %v190 = vpack.c.bf16 %v87, %v86
    %v191 = vpack.c.bf16 %v89, %v88
    %v193 = vlaneseq
    %v194 = vshrl.u32 %v193, 7
    %v195 = vsub.s32 0, %v194
    %v196 = vrot.slane %v186, %v195
    %v197 = vlaneseq
    %v198 = vshrl.u32 %v197, 7
    %v199 = vsub.s32 1, %v198
    %v200 = vrot.slane %v186, %v199
    %v201 = vlaneseq
    %v202 = vshrl.u32 %v201, 7
    %v203 = vsub.s32 2, %v202
    %v204 = vrot.slane %v186, %v203
    %v205 = vlaneseq
    %v206 = vshrl.u32 %v205, 7
    %v207 = vsub.s32 3, %v206
    %v208 = vrot.slane %v186, %v207
    %v245 = vunpack.c.l.b16 %v90
    %v246 = vunpack.c.h.b16 %v90
    %v247 = vunpack.c.l.b16 %v91
    %v248 = vunpack.c.h.b16 %v91
    %v249 = vunpack.c.l.b16 %v92
    %v250 = vunpack.c.h.b16 %v92
    %v251 = vunpack.c.l.b16 %v93
    %v252 = vunpack.c.h.b16 %v93
    %v253 = vunpack.c.l.b16 %v94
    %v254 = vunpack.c.h.b16 %v94
    %v255 = vunpack.c.l.b16 %v95
    %v256 = vunpack.c.h.b16 %v95
    %v257 = vunpack.c.l.b16 %v96
    %v258 = vunpack.c.h.b16 %v96
    %v259 = vunpack.c.l.b16 %v97
    %v260 = vunpack.c.h.b16 %v97
    %v261 = vunpack.c.l.b16 %v98
    %v262 = vunpack.c.h.b16 %v98
    %v263 = vunpack.c.l.b16 %v99
    %v264 = vunpack.c.h.b16 %v99
    %v265 = vunpack.c.l.b16 %v100
    %v266 = vunpack.c.h.b16 %v100
    %v267 = vunpack.c.l.b16 %v101
    %v268 = vunpack.c.h.b16 %v101
    %v269 = vunpack.c.l.b16 %v102
    %v270 = vunpack.c.h.b16 %v102
    %v271 = vunpack.c.l.b16 %v103
    %v272 = vunpack.c.h.b16 %v103
    %v273 = vunpack.c.l.b16 %v104
    %v274 = vunpack.c.h.b16 %v104
    %v275 = vunpack.c.l.b16 %v105
    %v276 = vunpack.c.h.b16 %v105
    %v277 = vunpack.c.l.b16 %v106
    %v278 = vunpack.c.h.b16 %v106
    %v279 = vunpack.c.l.b16 %v107
    %v280 = vunpack.c.h.b16 %v107
    %v281 = vunpack.c.l.b16 %v108
    %v282 = vunpack.c.h.b16 %v108
    %v283 = vunpack.c.l.b16 %v109
    %v284 = vunpack.c.h.b16 %v109
    %v285 = vunpack.c.l.b16 %v110
    %v286 = vunpack.c.h.b16 %v110
    %v287 = vunpack.c.l.b16 %v111
    %v288 = vunpack.c.h.b16 %v111
    %v289 = vunpack.c.l.b16 %v112
    %v290 = vunpack.c.h.b16 %v112
    %v291 = vunpack.c.l.b16 %v113
    %v292 = vunpack.c.h.b16 %v113
    %v293 = vunpack.c.l.b16 %v114
    %v294 = vunpack.c.h.b16 %v114
    %v295 = vunpack.c.l.b16 %v115
    %v296 = vunpack.c.h.b16 %v115
    %v297 = vunpack.c.l.b16 %v116
    %v298 = vunpack.c.h.b16 %v116
    %v299 = vunpack.c.l.b16 %v117
    %v300 = vunpack.c.h.b16 %v117
    %v301 = vunpack.c.l.b16 %v118
    %v302 = vunpack.c.h.b16 %v118
    %v303 = vunpack.c.l.b16 %v119
    %v304 = vunpack.c.h.b16 %v119
    %v305 = vunpack.c.l.b16 %v120
    %v306 = vunpack.c.h.b16 %v120
    %v307 = vunpack.c.l.b16 %v121
    %v308 = vunpack.c.h.b16 %v121
    %v309 = vpack.c.b16 %v249, %v245
    %v310 = vpack.c.b16 %v250, %v246
    %v311 = vpack.c.b16 %v251, %v247
    %v312 = vpack.c.b16 %v252, %v248
    %v313 = vpack.c.b16 %v257, %v253
    %v314 = vpack.c.b16 %v258, %v254
    %v315 = vpack.c.b16 %v259, %v255
    %v316 = vpack.c.b16 %v260, %v256
    %v317 = vpack.c.b16 %v265, %v261
    %v318 = vpack.c.b16 %v266, %v262
    %v319 = vpack.c.b16 %v267, %v263
    %v320 = vpack.c.b16 %v268, %v264
    %v321 = vpack.c.b16 %v273, %v269
    %v322 = vpack.c.b16 %v274, %v270
    %v323 = vpack.c.b16 %v275, %v271
    %v324 = vpack.c.b16 %v276, %v272
    %v325 = vpack.c.b16 %v281, %v277
    %v326 = vpack.c.b16 %v282, %v278
    %v327 = vpack.c.b16 %v283, %v279
    %v328 = vpack.c.b16 %v284, %v280
    %v329 = vpack.c.b16 %v289, %v285
    %v330 = vpack.c.b16 %v290, %v286
    %v331 = vpack.c.b16 %v291, %v287
    %v332 = vpack.c.b16 %v292, %v288
    %v333 = vpack.c.b16 %v297, %v293
    %v334 = vpack.c.b16 %v298, %v294
    %v335 = vpack.c.b16 %v299, %v295
    %v336 = vpack.c.b16 %v300, %v296
    %v337 = vpack.c.b16 %v305, %v301
    %v338 = vpack.c.b16 %v306, %v302
    %v339 = vpack.c.b16 %v307, %v303
    %v340 = vpack.c.b16 %v308, %v304
    %373 = vmatprep.subr.bf16.mxu0 %v338
    %374 = vmatpush1.bf16.msra.mxu0 %v337
    %375 = vmatprep.subr.bf16.mxu0 %v334
    %376 = vmatpush1.bf16.msra.mxu0 %v333
    %377 = vmatprep.subr.bf16.mxu0 %v330
    %378 = vmatpush1.bf16.msra.mxu0 %v329
    %379 = vmatprep.subr.bf16.mxu0 %v326
    %380 = vmatpush1.bf16.msra.mxu0 %v325
    %381 = vmatprep.subr.bf16.mxu0 %v322
    %382 = vmatpush1.bf16.msra.mxu0 %v321
    %383 = vmatprep.subr.bf16.mxu0 %v318
    %384 = vmatpush1.bf16.msra.mxu0 %v317
    %385 = vmatprep.subr.bf16.mxu0 %v314
    %386 = vmatpush1.bf16.msra.mxu0 %v313
    %387 = vmatprep.subr.bf16.mxu0 %v310
    %388 = vmatpush1.bf16.msra.mxu0 %v309
    %389 = vmatprep.subr.bf16.mxu0 0
    %390 = vmatpush2.bf16.msra.mxu0 0
    %391 = vmatprep.subr.bf16.mxu0 0
    %392 = vmatpush2.bf16.msra.mxu0 0
    %393 = vmatprep.subr.bf16.mxu0 0
    %394 = vmatpush2.bf16.msra.mxu0 0
    %395 = vmatprep.subr.bf16.mxu0 0
    %396 = vmatpush2.bf16.msra.mxu0 0
    %397 = vmatprep.subr.bf16.mxu0 0
    %398 = vmatpush2.bf16.msra.mxu0 0
    %399 = vmatprep.subr.bf16.mxu0 0
    %400 = vmatpush2.bf16.msra.mxu0 0
    %401 = vmatprep.subr.bf16.mxu0 0
    %402 = vmatpush2.bf16.msra.mxu0 0
    %403 = vmatprep.subr.bf16.mxu0 0
    %404 = vmatpush2.bf16.msra.mxu0 0
    %405 = vmatprep.mubr.bf16.mxu0 0
    %406 = vmatmul.mubr.bf16.gmra.mxu0 %v188
    %v407 = vpop.f32.mrf.mxu0
    %v408 = vadd.f32 %v196, %v407
    %v409 = vpop.f32.mrf.mxu0
    %v410 = vadd.f32 %v200, %v409
    %v411 = vpop.f32.mrf.mxu0
    %v412 = vadd.f32 %v196, %v411
    %v413 = vpop.f32.mrf.mxu0
    %v414 = vadd.f32 %v200, %v413
    %415 = vmatprep.mubr.bf16.mxu0 0
    %416 = vmatmul.mubr.bf16.gmra.mxu0 %v189
    %v417 = vpop.f32.mrf.mxu0
    %v418 = vadd.f32 %v196, %v417
    %v419 = vpop.f32.mrf.mxu0
    %v420 = vadd.f32 %v200, %v419
    %v421 = vpop.f32.mrf.mxu0
    %v422 = vadd.f32 %v196, %v421
    %v423 = vpop.f32.mrf.mxu0
    %v424 = vadd.f32 %v200, %v423
    %425 = vmatprep.mubr.bf16.mxu0 0
    %426 = vmatmul.mubr.bf16.gmra.mxu0 %v190
    %v427 = vpop.f32.mrf.mxu0
    %v428 = vadd.f32 %v196, %v427
    %v429 = vpop.f32.mrf.mxu0
    %v430 = vadd.f32 %v200, %v429
    %v431 = vpop.f32.mrf.mxu0
    %v432 = vadd.f32 %v196, %v431
    %v433 = vpop.f32.mrf.mxu0
    %v434 = vadd.f32 %v200, %v433
    %435 = vmatprep.mubr.bf16.mxu0 0
    %436 = vmatmul.mubr.bf16.gmra.mxu0 %v191
    %v437 = vpop.f32.mrf.mxu0
    %v438 = vadd.f32 %v196, %v437
    %v439 = vpop.f32.mrf.mxu0
    %v440 = vadd.f32 %v200, %v439
    %v441 = vpop.f32.mrf.mxu0
    %v442 = vadd.f32 %v196, %v441
    %v443 = vpop.f32.mrf.mxu0
    %v444 = vadd.f32 %v200, %v443
    %445 = vdwg.mxu0
    %446 = vmatprep.subr.bf16.mxu0 %v340
    %447 = vmatpush1.bf16.msra.mxu0 %v339
    %448 = vmatprep.subr.bf16.mxu0 %v336
    %449 = vmatpush1.bf16.msra.mxu0 %v335
    %450 = vmatprep.subr.bf16.mxu0 %v332
    %451 = vmatpush1.bf16.msra.mxu0 %v331
    %452 = vmatprep.subr.bf16.mxu0 %v328
    %453 = vmatpush1.bf16.msra.mxu0 %v327
    %454 = vmatprep.subr.bf16.mxu0 %v324
    %455 = vmatpush1.bf16.msra.mxu0 %v323
    %456 = vmatprep.subr.bf16.mxu0 %v320
    %457 = vmatpush1.bf16.msra.mxu0 %v319
    %458 = vmatprep.subr.bf16.mxu0 %v316
    %459 = vmatpush1.bf16.msra.mxu0 %v315
    %460 = vmatprep.subr.bf16.mxu0 %v312
    %461 = vmatpush1.bf16.msra.mxu0 %v311
    %462 = vmatprep.subr.bf16.mxu0 0
    %463 = vmatpush2.bf16.msra.mxu0 0
    %464 = vmatprep.subr.bf16.mxu0 0
    %465 = vmatpush2.bf16.msra.mxu0 0
    %466 = vmatprep.subr.bf16.mxu0 0
    %467 = vmatpush2.bf16.msra.mxu0 0
    %468 = vmatprep.subr.bf16.mxu0 0
    %469 = vmatpush2.bf16.msra.mxu0 0
    %470 = vmatprep.subr.bf16.mxu0 0
    %471 = vmatpush2.bf16.msra.mxu0 0
    %472 = vmatprep.subr.bf16.mxu0 0
    %473 = vmatpush2.bf16.msra.mxu0 0
    %474 = vmatprep.subr.bf16.mxu0 0
    %475 = vmatpush2.bf16.msra.mxu0 0
    %476 = vmatprep.subr.bf16.mxu0 0
    %477 = vmatpush2.bf16.msra.mxu0 0
    %478 = vmatprep.mubr.bf16.mxu0 0
    %479 = vmatmul.mubr.bf16.gmra.mxu0 %v188
    %v480 = vpop.f32.mrf.mxu0
    %v481 = vadd.f32 %v204, %v480
    %v482 = vpop.f32.mrf.mxu0
    %v483 = vadd.f32 %v208, %v482
    %v484 = vpop.f32.mrf.mxu0
    %v485 = vadd.f32 %v204, %v484
    %v486 = vpop.f32.mrf.mxu0
    %v487 = vadd.f32 %v208, %v486
    %488 = vmatprep.mubr.bf16.mxu0 0
    %489 = vmatmul.mubr.bf16.gmra.mxu0 %v189
    %v490 = vpop.f32.mrf.mxu0
    %v491 = vadd.f32 %v204, %v490
    %v492 = vpop.f32.mrf.mxu0
    %v493 = vadd.f32 %v208, %v492
    %v494 = vpop.f32.mrf.mxu0
    %v495 = vadd.f32 %v204, %v494
    %v496 = vpop.f32.mrf.mxu0
    %v497 = vadd.f32 %v208, %v496
    %498 = vmatprep.mubr.bf16.mxu0 0
    %499 = vmatmul.mubr.bf16.gmra.mxu0 %v190
    %v500 = vpop.f32.mrf.mxu0
    %v501 = vadd.f32 %v204, %v500
    %v502 = vpop.f32.mrf.mxu0
    %v503 = vadd.f32 %v208, %v502
    %v504 = vpop.f32.mrf.mxu0
    %v505 = vadd.f32 %v204, %v504
    %v506 = vpop.f32.mrf.mxu0
    %v507 = vadd.f32 %v208, %v506
    %508 = vmatprep.mubr.bf16.mxu0 0
    %509 = vmatmul.mubr.bf16.gmra.mxu0 %v191
    %v510 = vpop.f32.mrf.mxu0
    %v511 = vadd.f32 %v204, %v510
    %v512 = vpop.f32.mrf.mxu0
    %v513 = vadd.f32 %v208, %v512
    %v514 = vpop.f32.mrf.mxu0
    %v515 = vadd.f32 %v204, %v514
    %v516 = vpop.f32.mrf.mxu0
    %v517 = vadd.f32 %v208, %v516
    %518 = vdwg.mxu0
    %v519 = vpack.c.bf16 %v412, %v408
    %v520 = vpack.c.bf16 %v414, %v410
    %v521 = vpack.c.bf16 %v485, %v481
    %v522 = vpack.c.bf16 %v487, %v483
    %v523 = vpack.c.bf16 %v422, %v418
    %v524 = vpack.c.bf16 %v424, %v420
    %v525 = vpack.c.bf16 %v495, %v491
    %v526 = vpack.c.bf16 %v497, %v493
    %v527 = vpack.c.bf16 %v432, %v428
    %v528 = vpack.c.bf16 %v434, %v430
    %v529 = vpack.c.bf16 %v505, %v501
    %v530 = vpack.c.bf16 %v507, %v503
    %v531 = vpack.c.bf16 %v442, %v438
    %v532 = vpack.c.bf16 %v444, %v440
    %v533 = vpack.c.bf16 %v515, %v511
    %v534 = vpack.c.bf16 %v517, %v513
    %v535 = vmul.bf16 %v519, 1056980736
    %v536 = vmul.bf16 %v523, 1056980736
    %v537 = vmul.bf16 %v527, 1056980736
    %v538 = vmul.bf16 %v531, 1056980736
    %v539 = vtanh.bf16.pop %v535
    %v540 = vtanh.bf16.pop %v536
    %v541 = vtanh.bf16.pop %v537
    %v542 = vtanh.bf16.pop %v538
    %v543 = vadd.bf16 %v539, 1065369472
    %v544 = vadd.bf16 %v540, 1065369472
    %v545 = vadd.bf16 %v541, 1065369472
    %v546 = vadd.bf16 %v542, 1065369472
    %v547 = vmul.bf16 %v543, 1056980736
    %v548 = vmul.bf16 %v544, 1056980736
    %v549 = vmul.bf16 %v545, 1056980736
    %v550 = vmul.bf16 %v546, 1056980736
    %v551 = vmul.bf16 %v520, 1056980736
    %v552 = vmul.bf16 %v524, 1056980736
    %v553 = vmul.bf16 %v528, 1056980736
    %v554 = vmul.bf16 %v532, 1056980736
    %v555 = vtanh.bf16.pop %v551
    %v556 = vtanh.bf16.pop %v552
    %v557 = vtanh.bf16.pop %v553
    %v558 = vtanh.bf16.pop %v554
    %v559 = vadd.bf16 %v555, 1065369472
    %v560 = vadd.bf16 %v556, 1065369472
    %v561 = vadd.bf16 %v557, 1065369472
    %v562 = vadd.bf16 %v558, 1065369472
    %v563 = vmul.bf16 %v559, 1056980736
    %v564 = vmul.bf16 %v560, 1056980736
    %v565 = vmul.bf16 %v561, 1056980736
    %v566 = vmul.bf16 %v562, 1056980736
    %v567 = vtanh.bf16.pop %v521
    %v568 = vtanh.bf16.pop %v525
    %v569 = vtanh.bf16.pop %v529
    %v570 = vtanh.bf16.pop %v533
    %v571 = vmul.bf16 %v522, 1056980736
    %v572 = vmul.bf16 %v526, 1056980736
    %v573 = vmul.bf16 %v530, 1056980736
    %v574 = vmul.bf16 %v534, 1056980736
    %v575 = vtanh.bf16.pop %v571
    %v576 = vtanh.bf16.pop %v572
    %v577 = vtanh.bf16.pop %v573
    %v578 = vtanh.bf16.pop %v574
    %v579 = vadd.bf16 %v575, 1065369472
    %v580 = vadd.bf16 %v576, 1065369472
    %v581 = vadd.bf16 %v577, 1065369472
    %v582 = vadd.bf16 %v578, 1065369472
    %v583 = vmul.bf16 %v579, 1056980736
    %v584 = vmul.bf16 %v580, 1056980736
    %v585 = vmul.bf16 %v581, 1056980736
    %v586 = vmul.bf16 %v582, 1056980736
    %v587 = vunpack.c.l.bf16 %v563
    %v588 = vunpack.c.h.bf16 %v563
    %v589 = vunpack.c.l.bf16 %v564
    %v590 = vunpack.c.h.bf16 %v564
    %v591 = vunpack.c.l.bf16 %v565
    %v592 = vunpack.c.h.bf16 %v565
    %v593 = vunpack.c.l.bf16 %v566
    %v594 = vunpack.c.h.bf16 %v566
    %v595 = vmul.f32 %v587, 0.0
    %v596 = vmul.f32 %v588, 0.0
    %v597 = vmul.f32 %v589, 0.0
    %v598 = vmul.f32 %v590, 0.0
    %v599 = vmul.f32 %v591, 0.0
    %v600 = vmul.f32 %v592, 0.0
    %v601 = vmul.f32 %v593, 0.0
    %v602 = vmul.f32 %v594, 0.0
    %v603 = vmul.bf16 %v547, %v567
    %v604 = vmul.bf16 %v548, %v568
    %v605 = vmul.bf16 %v549, %v569
    %v606 = vmul.bf16 %v550, %v570
    %v607 = vunpack.c.l.bf16 %v603
    %v608 = vunpack.c.h.bf16 %v603
    %v609 = vunpack.c.l.bf16 %v604
    %v610 = vunpack.c.h.bf16 %v604
    %v611 = vunpack.c.l.bf16 %v605
    %v612 = vunpack.c.h.bf16 %v605
    %v613 = vunpack.c.l.bf16 %v606
    %v614 = vunpack.c.h.bf16 %v606
    %v615 = vadd.f32 %v595, %v607
    %v616 = vadd.f32 %v596, %v608
    %v617 = vadd.f32 %v597, %v609
    %v618 = vadd.f32 %v598, %v610
    %v619 = vadd.f32 %v599, %v611
    %v620 = vadd.f32 %v600, %v612
    %v621 = vadd.f32 %v601, %v613
    %v622 = vadd.f32 %v602, %v614
    %v623 = vpack.c.bf16 %v616, %v615
    %v624 = vpack.c.bf16 %v618, %v617
    %v625 = vpack.c.bf16 %v620, %v619
    %v626 = vpack.c.bf16 %v622, %v621
    %v627 = vtanh.bf16.pop %v623
    %v628 = vtanh.bf16.pop %v624
    %v629 = vtanh.bf16.pop %v625
    %v630 = vtanh.bf16.pop %v626
    %v631 = vmul.bf16 %v583, %v627
    %v632 = vmul.bf16 %v584, %v628
    %v633 = vmul.bf16 %v585, %v629
    %v634 = vmul.bf16 %v586, %v630
    %v667 = vunpack.c.l.b16 %v122
    %v668 = vunpack.c.h.b16 %v122
    %v669 = vunpack.c.l.b16 %v123
    %v670 = vunpack.c.h.b16 %v123
    %v671 = vunpack.c.l.b16 %v124
    %v672 = vunpack.c.h.b16 %v124
    %v673 = vunpack.c.l.b16 %v125
    %v674 = vunpack.c.h.b16 %v125
    %v675 = vunpack.c.l.b16 %v126
    %v676 = vunpack.c.h.b16 %v126
    %v677 = vunpack.c.l.b16 %v127
    %v678 = vunpack.c.h.b16 %v127
    %v679 = vunpack.c.l.b16 %v128
    %v680 = vunpack.c.h.b16 %v128
    %v681 = vunpack.c.l.b16 %v129
    %v682 = vunpack.c.h.b16 %v129
    %v683 = vunpack.c.l.b16 %v130
    %v684 = vunpack.c.h.b16 %v130
    %v685 = vunpack.c.l.b16 %v131
    %v686 = vunpack.c.h.b16 %v131
    %v687 = vunpack.c.l.b16 %v132
    %v688 = vunpack.c.h.b16 %v132
    %v689 = vunpack.c.l.b16 %v133
    %v690 = vunpack.c.h.b16 %v133
    %v691 = vunpack.c.l.b16 %v134
    %v692 = vunpack.c.h.b16 %v134
    %v693 = vunpack.c.l.b16 %v135
    %v694 = vunpack.c.h.b16 %v135
    %v695 = vunpack.c.l.b16 %v136
    %v696 = vunpack.c.h.b16 %v136
    %v697 = vunpack.c.l.b16 %v137
    %v698 = vunpack.c.h.b16 %v137
    %v699 = vunpack.c.l.b16 %v138
    %v700 = vunpack.c.h.b16 %v138
    %v701 = vunpack.c.l.b16 %v139
    %v702 = vunpack.c.h.b16 %v139
    %v703 = vunpack.c.l.b16 %v140
    %v704 = vunpack.c.h.b16 %v140
    %v705 = vunpack.c.l.b16 %v141
    %v706 = vunpack.c.h.b16 %v141
    %v707 = vunpack.c.l.b16 %v142
    %v708 = vunpack.c.h.b16 %v142
    %v709 = vunpack.c.l.b16 %v143
    %v710 = vunpack.c.h.b16 %v143
    %v711 = vunpack.c.l.b16 %v144
    %v712 = vunpack.c.h.b16 %v144
    %v713 = vunpack.c.l.b16 %v145
    %v714 = vunpack.c.h.b16 %v145
    %v715 = vunpack.c.l.b16 %v146
    %v716 = vunpack.c.h.b16 %v146
    %v717 = vunpack.c.l.b16 %v147
    %v718 = vunpack.c.h.b16 %v147
    %v719 = vunpack.c.l.b16 %v148
    %v720 = vunpack.c.h.b16 %v148
    %v721 = vunpack.c.l.b16 %v149
    %v722 = vunpack.c.h.b16 %v149
    %v723 = vunpack.c.l.b16 %v150
    %v724 = vunpack.c.h.b16 %v150
    %v725 = vunpack.c.l.b16 %v151
    %v726 = vunpack.c.h.b16 %v151
    %v727 = vunpack.c.l.b16 %v152
    %v728 = vunpack.c.h.b16 %v152
    %v729 = vunpack.c.l.b16 %v153
    %v730 = vunpack.c.h.b16 %v153
    %v731 = vpack.c.b16 %v671, %v667
    %v732 = vpack.c.b16 %v672, %v668
    %v733 = vpack.c.b16 %v673, %v669
    %v734 = vpack.c.b16 %v674, %v670
    %v735 = vpack.c.b16 %v679, %v675
    %v736 = vpack.c.b16 %v680, %v676
    %v737 = vpack.c.b16 %v681, %v677
    %v738 = vpack.c.b16 %v682, %v678
    %v739 = vpack.c.b16 %v687, %v683
    %v740 = vpack.c.b16 %v688, %v684
    %v741 = vpack.c.b16 %v689, %v685
    %v742 = vpack.c.b16 %v690, %v686
    %v743 = vpack.c.b16 %v695, %v691
    %v744 = vpack.c.b16 %v696, %v692
    %v745 = vpack.c.b16 %v697, %v693
    %v746 = vpack.c.b16 %v698, %v694
    %v747 = vpack.c.b16 %v703, %v699
    %v748 = vpack.c.b16 %v704, %v700
    %v749 = vpack.c.b16 %v705, %v701
    %v750 = vpack.c.b16 %v706, %v702
    %v751 = vpack.c.b16 %v711, %v707
    %v752 = vpack.c.b16 %v712, %v708
    %v753 = vpack.c.b16 %v713, %v709
    %v754 = vpack.c.b16 %v714, %v710
    %v755 = vpack.c.b16 %v719, %v715
    %v756 = vpack.c.b16 %v720, %v716
    %v757 = vpack.c.b16 %v721, %v717
    %v758 = vpack.c.b16 %v722, %v718
    %v759 = vpack.c.b16 %v727, %v723
    %v760 = vpack.c.b16 %v728, %v724
    %v761 = vpack.c.b16 %v729, %v725
    %v762 = vpack.c.b16 %v730, %v726
    %795 = vmatprep.subr.bf16.mxu0 %v760
    %796 = vmatpush1.bf16.msra.mxu0 %v759
    %797 = vmatprep.subr.bf16.mxu0 %v756
    %798 = vmatpush1.bf16.msra.mxu0 %v755
    %799 = vmatprep.subr.bf16.mxu0 %v752
    %800 = vmatpush1.bf16.msra.mxu0 %v751
    %801 = vmatprep.subr.bf16.mxu0 %v748
    %802 = vmatpush1.bf16.msra.mxu0 %v747
    %803 = vmatprep.subr.bf16.mxu0 %v744
    %804 = vmatpush1.bf16.msra.mxu0 %v743
    %805 = vmatprep.subr.bf16.mxu0 %v740
    %806 = vmatpush1.bf16.msra.mxu0 %v739
    %807 = vmatprep.subr.bf16.mxu0 %v736
    %808 = vmatpush1.bf16.msra.mxu0 %v735
    %809 = vmatprep.subr.bf16.mxu0 %v732
    %810 = vmatpush1.bf16.msra.mxu0 %v731
    %811 = vmatprep.subr.bf16.mxu0 0
    %812 = vmatpush2.bf16.msra.mxu0 0
    %813 = vmatprep.subr.bf16.mxu0 0
    %814 = vmatpush2.bf16.msra.mxu0 0
    %815 = vmatprep.subr.bf16.mxu0 0
    %816 = vmatpush2.bf16.msra.mxu0 0
    %817 = vmatprep.subr.bf16.mxu0 0
    %818 = vmatpush2.bf16.msra.mxu0 0
    %819 = vmatprep.subr.bf16.mxu0 0
    %820 = vmatpush2.bf16.msra.mxu0 0
    %821 = vmatprep.subr.bf16.mxu0 0
    %822 = vmatpush2.bf16.msra.mxu0 0
    %823 = vmatprep.subr.bf16.mxu0 0
    %824 = vmatpush2.bf16.msra.mxu0 0
    %825 = vmatprep.subr.bf16.mxu0 0
    %826 = vmatpush2.bf16.msra.mxu0 0
    %827 = vmatprep.mubr.bf16.mxu0 0
    %828 = vmatmul.mubr.bf16.gmra.mxu0 %v631
    %v829 = vpop.f32.mrf.mxu0
    %v830 = vadd.f32 0.0, %v829
    %v831 = vpop.f32.mrf.mxu0
    %v832 = vadd.f32 0.0, %v831
    %v833 = vpop.f32.mrf.mxu0
    %v834 = vadd.f32 0.0, %v833
    %v835 = vpop.f32.mrf.mxu0
    %v836 = vadd.f32 0.0, %v835
    %837 = vmatprep.mubr.bf16.mxu0 0
    %838 = vmatmul.mubr.bf16.gmra.mxu0 %v632
    %v839 = vpop.f32.mrf.mxu0
    %v840 = vadd.f32 0.0, %v839
    %v841 = vpop.f32.mrf.mxu0
    %v842 = vadd.f32 0.0, %v841
    %v843 = vpop.f32.mrf.mxu0
    %v844 = vadd.f32 0.0, %v843
    %v845 = vpop.f32.mrf.mxu0
    %v846 = vadd.f32 0.0, %v845
    %847 = vmatprep.mubr.bf16.mxu0 0
    %848 = vmatmul.mubr.bf16.gmra.mxu0 %v633
    %v849 = vpop.f32.mrf.mxu0
    %v850 = vadd.f32 0.0, %v849
    %v851 = vpop.f32.mrf.mxu0
    %v852 = vadd.f32 0.0, %v851
    %v853 = vpop.f32.mrf.mxu0
    %v854 = vadd.f32 0.0, %v853
    %v855 = vpop.f32.mrf.mxu0
    %v856 = vadd.f32 0.0, %v855
    %857 = vmatprep.mubr.bf16.mxu0 0
    %858 = vmatmul.mubr.bf16.gmra.mxu0 %v634
    %v859 = vpop.f32.mrf.mxu0
    %v860 = vadd.f32 0.0, %v859
    %v861 = vpop.f32.mrf.mxu0
    %v862 = vadd.f32 0.0, %v861
    %v863 = vpop.f32.mrf.mxu0
    %v864 = vadd.f32 0.0, %v863
    %v865 = vpop.f32.mrf.mxu0
    %v866 = vadd.f32 0.0, %v865
    %867 = vdwg.mxu0
    %868 = vmatprep.subr.bf16.mxu0 %v762
    %869 = vmatpush1.bf16.msra.mxu0 %v761
    %870 = vmatprep.subr.bf16.mxu0 %v758
    %871 = vmatpush1.bf16.msra.mxu0 %v757
    %872 = vmatprep.subr.bf16.mxu0 %v754
    %873 = vmatpush1.bf16.msra.mxu0 %v753
    %874 = vmatprep.subr.bf16.mxu0 %v750
    %875 = vmatpush1.bf16.msra.mxu0 %v749
    %876 = vmatprep.subr.bf16.mxu0 %v746
    %877 = vmatpush1.bf16.msra.mxu0 %v745
    %878 = vmatprep.subr.bf16.mxu0 %v742
    %879 = vmatpush1.bf16.msra.mxu0 %v741
    %880 = vmatprep.subr.bf16.mxu0 %v738
    %881 = vmatpush1.bf16.msra.mxu0 %v737
    %882 = vmatprep.subr.bf16.mxu0 %v734
    %883 = vmatpush1.bf16.msra.mxu0 %v733
    %884 = vmatprep.subr.bf16.mxu0 0
    %885 = vmatpush2.bf16.msra.mxu0 0
    %886 = vmatprep.subr.bf16.mxu0 0
    %887 = vmatpush2.bf16.msra.mxu0 0
    %888 = vmatprep.subr.bf16.mxu0 0
    %889 = vmatpush2.bf16.msra.mxu0 0
    %890 = vmatprep.subr.bf16.mxu0 0
    %891 = vmatpush2.bf16.msra.mxu0 0
    %892 = vmatprep.subr.bf16.mxu0 0
    %893 = vmatpush2.bf16.msra.mxu0 0
    %894 = vmatprep.subr.bf16.mxu0 0
    %895 = vmatpush2.bf16.msra.mxu0 0
    %896 = vmatprep.subr.bf16.mxu0 0
    %897 = vmatpush2.bf16.msra.mxu0 0
    %898 = vmatprep.subr.bf16.mxu0 0
    %899 = vmatpush2.bf16.msra.mxu0 0
    %900 = vmatprep.mubr.bf16.mxu0 0
    %901 = vmatmul.mubr.bf16.gmra.mxu0 %v631
    %v902 = vpop.f32.mrf.mxu0
    %v903 = vadd.f32 0.0, %v902
    %v904 = vpop.f32.mrf.mxu0
    %v905 = vadd.f32 0.0, %v904
    %v906 = vpop.f32.mrf.mxu0
    %v907 = vadd.f32 0.0, %v906
    %v908 = vpop.f32.mrf.mxu0
    %v909 = vadd.f32 0.0, %v908
    %910 = vmatprep.mubr.bf16.mxu0 0
    %911 = vmatmul.mubr.bf16.gmra.mxu0 %v632
    %v912 = vpop.f32.mrf.mxu0
    %v913 = vadd.f32 0.0, %v912
    %v914 = vpop.f32.mrf.mxu0
    %v915 = vadd.f32 0.0, %v914
    %v916 = vpop.f32.mrf.mxu0
    %v917 = vadd.f32 0.0, %v916
    %v918 = vpop.f32.mrf.mxu0
    %v919 = vadd.f32 0.0, %v918
    %920 = vmatprep.mubr.bf16.mxu0 0
    %921 = vmatmul.mubr.bf16.gmra.mxu0 %v633
    %v922 = vpop.f32.mrf.mxu0
    %v923 = vadd.f32 0.0, %v922
    %v924 = vpop.f32.mrf.mxu0
    %v925 = vadd.f32 0.0, %v924
    %v926 = vpop.f32.mrf.mxu0
    %v927 = vadd.f32 0.0, %v926
    %v928 = vpop.f32.mrf.mxu0
    %v929 = vadd.f32 0.0, %v928
    %930 = vmatprep.mubr.bf16.mxu0 0
    %931 = vmatmul.mubr.bf16.gmra.mxu0 %v634
    %v932 = vpop.f32.mrf.mxu0
    %v933 = vadd.f32 0.0, %v932
    %v934 = vpop.f32.mrf.mxu0
    %v935 = vadd.f32 0.0, %v934
    %v936 = vpop.f32.mrf.mxu0
    %v937 = vadd.f32 0.0, %v936
    %v938 = vpop.f32.mrf.mxu0
    %v939 = vadd.f32 0.0, %v938
    %940 = vdwg.mxu0
    %v941 = vadd.f32 %v408, %v830
    %v942 = vadd.f32 %v410, %v832
    %v943 = vadd.f32 %v481, %v903
    %v944 = vadd.f32 %v483, %v905
    %v945 = vadd.f32 %v412, %v834
    %v946 = vadd.f32 %v414, %v836
    %v947 = vadd.f32 %v485, %v907
    %v948 = vadd.f32 %v487, %v909
    %v949 = vadd.f32 %v418, %v840
    %v950 = vadd.f32 %v420, %v842
    %v951 = vadd.f32 %v491, %v913
    %v952 = vadd.f32 %v493, %v915
    %v953 = vadd.f32 %v422, %v844
    %v954 = vadd.f32 %v424, %v846
    %v955 = vadd.f32 %v495, %v917
    %v956 = vadd.f32 %v497, %v919
    %v957 = vadd.f32 %v428, %v850
    %v958 = vadd.f32 %v430, %v852
    %v959 = vadd.f32 %v501, %v923
    %v960 = vadd.f32 %v503, %v925
    %v961 = vadd.f32 %v432, %v854
    %v962 = vadd.f32 %v434, %v856
    %v963 = vadd.f32 %v505, %v927
    %v964 = vadd.f32 %v507, %v929
    %v965 = vadd.f32 %v438, %v860
    %v966 = vadd.f32 %v440, %v862
    %v967 = vadd.f32 %v511, %v933
    %v968 = vadd.f32 %v513, %v935
    %v969 = vadd.f32 %v442, %v864
    %v970 = vadd.f32 %v444, %v866
    %v971 = vadd.f32 %v515, %v937
    %v972 = vadd.f32 %v517, %v939
    %v973 = vpack.c.bf16 %v945, %v941
    %v974 = vpack.c.bf16 %v946, %v942
    %v975 = vpack.c.bf16 %v947, %v943
    %v976 = vpack.c.bf16 %v948, %v944
    %v977 = vpack.c.bf16 %v953, %v949
    %v978 = vpack.c.bf16 %v954, %v950
    %v979 = vpack.c.bf16 %v955, %v951
    %v980 = vpack.c.bf16 %v956, %v952
    %v981 = vpack.c.bf16 %v961, %v957
    %v982 = vpack.c.bf16 %v962, %v958
    %v983 = vpack.c.bf16 %v963, %v959
    %v984 = vpack.c.bf16 %v964, %v960
    %v985 = vpack.c.bf16 %v969, %v965
    %v986 = vpack.c.bf16 %v970, %v966
    %v987 = vpack.c.bf16 %v971, %v967
    %v988 = vpack.c.bf16 %v972, %v968
    %v989 = vmul.bf16 %v973, 1056980736
    %v990 = vmul.bf16 %v977, 1056980736
    %v991 = vmul.bf16 %v981, 1056980736
    %v992 = vmul.bf16 %v985, 1056980736
    %v993 = vtanh.bf16.pop %v989
    %v994 = vtanh.bf16.pop %v990
    %v995 = vtanh.bf16.pop %v991
    %v996 = vtanh.bf16.pop %v992
    %v997 = vadd.bf16 %v993, 1065369472
    %v998 = vadd.bf16 %v994, 1065369472
    %v999 = vadd.bf16 %v995, 1065369472
    %v1000 = vadd.bf16 %v996, 1065369472
    %v1001 = vmul.bf16 %v997, 1056980736
    %v1002 = vmul.bf16 %v998, 1056980736
    %v1003 = vmul.bf16 %v999, 1056980736
    %v1004 = vmul.bf16 %v1000, 1056980736
    %v1005 = vmul.bf16 %v974, 1056980736
    %v1006 = vmul.bf16 %v978, 1056980736
    %v1007 = vmul.bf16 %v982, 1056980736
    %v1008 = vmul.bf16 %v986, 1056980736
    %v1009 = vtanh.bf16.pop %v1005
    %v1010 = vtanh.bf16.pop %v1006
    %v1011 = vtanh.bf16.pop %v1007
    %v1012 = vtanh.bf16.pop %v1008
    %v1013 = vadd.bf16 %v1009, 1065369472
    %v1014 = vadd.bf16 %v1010, 1065369472
    %v1015 = vadd.bf16 %v1011, 1065369472
    %v1016 = vadd.bf16 %v1012, 1065369472
    %v1017 = vmul.bf16 %v1013, 1056980736
    %v1018 = vmul.bf16 %v1014, 1056980736
    %v1019 = vmul.bf16 %v1015, 1056980736
    %v1020 = vmul.bf16 %v1016, 1056980736
    %v1021 = vtanh.bf16.pop %v975
    %v1022 = vtanh.bf16.pop %v979
    %v1023 = vtanh.bf16.pop %v983
    %v1024 = vtanh.bf16.pop %v987
    %v1025 = vmul.bf16 %v976, 1056980736
    %v1026 = vmul.bf16 %v980, 1056980736
    %v1027 = vmul.bf16 %v984, 1056980736
    %v1028 = vmul.bf16 %v988, 1056980736
    %v1029 = vtanh.bf16.pop %v1025
    %v1030 = vtanh.bf16.pop %v1026
    %v1031 = vtanh.bf16.pop %v1027
    %v1032 = vtanh.bf16.pop %v1028
    %v1033 = vadd.bf16 %v1029, 1065369472
    %v1034 = vadd.bf16 %v1030, 1065369472
    %v1035 = vadd.bf16 %v1031, 1065369472
    %v1036 = vadd.bf16 %v1032, 1065369472
    %v1037 = vmul.bf16 %v1033, 1056980736
    %v1038 = vmul.bf16 %v1034, 1056980736
    %v1039 = vmul.bf16 %v1035, 1056980736
    %v1040 = vmul.bf16 %v1036, 1056980736
    %v1041 = vunpack.c.l.bf16 %v1017
    %v1042 = vunpack.c.h.bf16 %v1017
    %v1043 = vunpack.c.l.bf16 %v1018
    %v1044 = vunpack.c.h.bf16 %v1018
    %v1045 = vunpack.c.l.bf16 %v1019
    %v1046 = vunpack.c.h.bf16 %v1019
    %v1047 = vunpack.c.l.bf16 %v1020
    %v1048 = vunpack.c.h.bf16 %v1020
    %v1049 = vmul.f32 %v1041, %v615
    %v1050 = vmul.f32 %v1042, %v616
    %v1051 = vmul.f32 %v1043, %v617
    %v1052 = vmul.f32 %v1044, %v618
    %v1053 = vmul.f32 %v1045, %v619
    %v1054 = vmul.f32 %v1046, %v620
    %v1055 = vmul.f32 %v1047, %v621
    %v1056 = vmul.f32 %v1048, %v622
    %v1057 = vmul.bf16 %v1001, %v1021
    %v1058 = vmul.bf16 %v1002, %v1022
    %v1059 = vmul.bf16 %v1003, %v1023
    %v1060 = vmul.bf16 %v1004, %v1024
    %v1061 = vunpack.c.l.bf16 %v1057
    %v1062 = vunpack.c.h.bf16 %v1057
    %v1063 = vunpack.c.l.bf16 %v1058
    %v1064 = vunpack.c.h.bf16 %v1058
    %v1065 = vunpack.c.l.bf16 %v1059
    %v1066 = vunpack.c.h.bf16 %v1059
    %v1067 = vunpack.c.l.bf16 %v1060
    %v1068 = vunpack.c.h.bf16 %v1060
    %v1069 = vadd.f32 %v1049, %v1061
    %v1070 = vadd.f32 %v1050, %v1062
    %v1071 = vadd.f32 %v1051, %v1063
    %v1072 = vadd.f32 %v1052, %v1064
    %v1073 = vadd.f32 %v1053, %v1065
    %v1074 = vadd.f32 %v1054, %v1066
    %v1075 = vadd.f32 %v1055, %v1067
    %v1076 = vadd.f32 %v1056, %v1068
    %v1077 = vpack.c.bf16 %v1070, %v1069
    %v1078 = vpack.c.bf16 %v1072, %v1071
    %v1079 = vpack.c.bf16 %v1074, %v1073
    %v1080 = vpack.c.bf16 %v1076, %v1075
    %v1081 = vtanh.bf16.pop %v1077
    %v1082 = vtanh.bf16.pop %v1078
    %v1083 = vtanh.bf16.pop %v1079
    %v1084 = vtanh.bf16.pop %v1080
    %v1085 = vmul.bf16 %v1037, %v1081
    %v1086 = vmul.bf16 %v1038, %v1082
    %v1087 = vmul.bf16 %v1039, %v1083
    %v1088 = vmul.bf16 %v1040, %v1084
    %1089 = vmatprep.subr.bf16.mxu0 %v760
    %1090 = vmatpush1.bf16.msra.mxu0 %v759
    %1091 = vmatprep.subr.bf16.mxu0 %v756
    %1092 = vmatpush1.bf16.msra.mxu0 %v755
    %1093 = vmatprep.subr.bf16.mxu0 %v752
    %1094 = vmatpush1.bf16.msra.mxu0 %v751
    %1095 = vmatprep.subr.bf16.mxu0 %v748
    %1096 = vmatpush1.bf16.msra.mxu0 %v747
    %1097 = vmatprep.subr.bf16.mxu0 %v744
    %1098 = vmatpush1.bf16.msra.mxu0 %v743
    %1099 = vmatprep.subr.bf16.mxu0 %v740
    %1100 = vmatpush1.bf16.msra.mxu0 %v739
    %1101 = vmatprep.subr.bf16.mxu0 %v736
    %1102 = vmatpush1.bf16.msra.mxu0 %v735
    %1103 = vmatprep.subr.bf16.mxu0 %v732
    %1104 = vmatpush1.bf16.msra.mxu0 %v731
    %1105 = vmatprep.subr.bf16.mxu0 0
    %1106 = vmatpush2.bf16.msra.mxu0 0
    %1107 = vmatprep.subr.bf16.mxu0 0
    %1108 = vmatpush2.bf16.msra.mxu0 0
    %1109 = vmatprep.subr.bf16.mxu0 0
    %1110 = vmatpush2.bf16.msra.mxu0 0
    %1111 = vmatprep.subr.bf16.mxu0 0
    %1112 = vmatpush2.bf16.msra.mxu0 0
    %1113 = vmatprep.subr.bf16.mxu0 0
    %1114 = vmatpush2.bf16.msra.mxu0 0
    %1115 = vmatprep.subr.bf16.mxu0 0
    %1116 = vmatpush2.bf16.msra.mxu0 0
    %1117 = vmatprep.subr.bf16.mxu0 0
    %1118 = vmatpush2.bf16.msra.mxu0 0
    %1119 = vmatprep.subr.bf16.mxu0 0
    %1120 = vmatpush2.bf16.msra.mxu0 0
    %1121 = vmatprep.mubr.bf16.mxu0 0
    %1122 = vmatmul.mubr.bf16.gmra.mxu0 %v1085
    %v1123 = vpop.f32.mrf.mxu0
    %v1124 = vadd.f32 0.0, %v1123
    %v1125 = vpop.f32.mrf.mxu0
    %v1126 = vadd.f32 0.0, %v1125
    %v1127 = vpop.f32.mrf.mxu0
    %v1128 = vadd.f32 0.0, %v1127
    %v1129 = vpop.f32.mrf.mxu0
    %v1130 = vadd.f32 0.0, %v1129
    %1131 = vmatprep.mubr.bf16.mxu0 0
    %1132 = vmatmul.mubr.bf16.gmra.mxu0 %v1086
    %v1133 = vpop.f32.mrf.mxu0
    %v1134 = vadd.f32 0.0, %v1133
    %v1135 = vpop.f32.mrf.mxu0
    %v1136 = vadd.f32 0.0, %v1135
    %v1137 = vpop.f32.mrf.mxu0
    %v1138 = vadd.f32 0.0, %v1137
    %v1139 = vpop.f32.mrf.mxu0
    %v1140 = vadd.f32 0.0, %v1139
    %1141 = vmatprep.mubr.bf16.mxu0 0
    %1142 = vmatmul.mubr.bf16.gmra.mxu0 %v1087
    %v1143 = vpop.f32.mrf.mxu0
    %v1144 = vadd.f32 0.0, %v1143
    %v1145 = vpop.f32.mrf.mxu0
    %v1146 = vadd.f32 0.0, %v1145
    %v1147 = vpop.f32.mrf.mxu0
    %v1148 = vadd.f32 0.0, %v1147
    %v1149 = vpop.f32.mrf.mxu0
    %v1150 = vadd.f32 0.0, %v1149
    %1151 = vmatprep.mubr.bf16.mxu0 0
    %1152 = vmatmul.mubr.bf16.gmra.mxu0 %v1088
    %v1153 = vpop.f32.mrf.mxu0
    %v1154 = vadd.f32 0.0, %v1153
    %v1155 = vpop.f32.mrf.mxu0
    %v1156 = vadd.f32 0.0, %v1155
    %v1157 = vpop.f32.mrf.mxu0
    %v1158 = vadd.f32 0.0, %v1157
    %v1159 = vpop.f32.mrf.mxu0
    %v1160 = vadd.f32 0.0, %v1159
    %1161 = vdwg.mxu0
    %1162 = vmatprep.subr.bf16.mxu0 %v762
    %1163 = vmatpush1.bf16.msra.mxu0 %v761
    %1164 = vmatprep.subr.bf16.mxu0 %v758
    %1165 = vmatpush1.bf16.msra.mxu0 %v757
    %1166 = vmatprep.subr.bf16.mxu0 %v754
    %1167 = vmatpush1.bf16.msra.mxu0 %v753
    %1168 = vmatprep.subr.bf16.mxu0 %v750
    %1169 = vmatpush1.bf16.msra.mxu0 %v749
    %1170 = vmatprep.subr.bf16.mxu0 %v746
    %1171 = vmatpush1.bf16.msra.mxu0 %v745
    %1172 = vmatprep.subr.bf16.mxu0 %v742
    %1173 = vmatpush1.bf16.msra.mxu0 %v741
    %1174 = vmatprep.subr.bf16.mxu0 %v738
    %1175 = vmatpush1.bf16.msra.mxu0 %v737
    %1176 = vmatprep.subr.bf16.mxu0 %v734
    %1177 = vmatpush1.bf16.msra.mxu0 %v733
    %1178 = vmatprep.subr.bf16.mxu0 0
    %1179 = vmatpush2.bf16.msra.mxu0 0
    %1180 = vmatprep.subr.bf16.mxu0 0
    %1181 = vmatpush2.bf16.msra.mxu0 0
    %1182 = vmatprep.subr.bf16.mxu0 0
    %1183 = vmatpush2.bf16.msra.mxu0 0
    %1184 = vmatprep.subr.bf16.mxu0 0
    %1185 = vmatpush2.bf16.msra.mxu0 0
    %1186 = vmatprep.subr.bf16.mxu0 0
    %1187 = vmatpush2.bf16.msra.mxu0 0
    %1188 = vmatprep.subr.bf16.mxu0 0
    %1189 = vmatpush2.bf16.msra.mxu0 0
    %1190 = vmatprep.subr.bf16.mxu0 0
    %1191 = vmatpush2.bf16.msra.mxu0 0
    %1192 = vmatprep.subr.bf16.mxu0 0
    %1193 = vmatpush2.bf16.msra.mxu0 0
    %1194 = vmatprep.mubr.bf16.mxu0 0
    %1195 = vmatmul.mubr.bf16.gmra.mxu0 %v1085
    %v1196 = vpop.f32.mrf.mxu0
    %v1197 = vadd.f32 0.0, %v1196
    %v1198 = vpop.f32.mrf.mxu0
    %v1199 = vadd.f32 0.0, %v1198
    %v1200 = vpop.f32.mrf.mxu0
    %v1201 = vadd.f32 0.0, %v1200
    %v1202 = vpop.f32.mrf.mxu0
    %v1203 = vadd.f32 0.0, %v1202
    %1204 = vmatprep.mubr.bf16.mxu0 0
    %1205 = vmatmul.mubr.bf16.gmra.mxu0 %v1086
    %v1206 = vpop.f32.mrf.mxu0
    %v1207 = vadd.f32 0.0, %v1206
    %v1208 = vpop.f32.mrf.mxu0
    %v1209 = vadd.f32 0.0, %v1208
    %v1210 = vpop.f32.mrf.mxu0
    %v1211 = vadd.f32 0.0, %v1210
    %v1212 = vpop.f32.mrf.mxu0
    %v1213 = vadd.f32 0.0, %v1212
    %1214 = vmatprep.mubr.bf16.mxu0 0
    %1215 = vmatmul.mubr.bf16.gmra.mxu0 %v1087
    %v1216 = vpop.f32.mrf.mxu0
    %v1217 = vadd.f32 0.0, %v1216
    %v1218 = vpop.f32.mrf.mxu0
    %v1219 = vadd.f32 0.0, %v1218
    %v1220 = vpop.f32.mrf.mxu0
    %v1221 = vadd.f32 0.0, %v1220
    %v1222 = vpop.f32.mrf.mxu0
    %v1223 = vadd.f32 0.0, %v1222
    %1224 = vmatprep.mubr.bf16.mxu0 0
    %1225 = vmatmul.mubr.bf16.gmra.mxu0 %v1088
    %v1226 = vpop.f32.mrf.mxu0
    %v1227 = vadd.f32 0.0, %v1226
    %v1228 = vpop.f32.mrf.mxu0
    %v1229 = vadd.f32 0.0, %v1228
    %v1230 = vpop.f32.mrf.mxu0
    %v1231 = vadd.f32 0.0, %v1230
    %v1232 = vpop.f32.mrf.mxu0
    %v1233 = vadd.f32 0.0, %v1232
    %1234 = vdwg.mxu0
    %v1235 = vadd.f32 %v408, %v1124
    %v1236 = vadd.f32 %v410, %v1126
    %v1237 = vadd.f32 %v481, %v1197
    %v1238 = vadd.f32 %v483, %v1199
    %v1239 = vadd.f32 %v412, %v1128
    %v1240 = vadd.f32 %v414, %v1130
    %v1241 = vadd.f32 %v485, %v1201
    %v1242 = vadd.f32 %v487, %v1203
    %v1243 = vadd.f32 %v418, %v1134
    %v1244 = vadd.f32 %v420, %v1136
    %v1245 = vadd.f32 %v491, %v1207
    %v1246 = vadd.f32 %v493, %v1209
    %v1247 = vadd.f32 %v422, %v1138
    %v1248 = vadd.f32 %v424, %v1140
    %v1249 = vadd.f32 %v495, %v1211
    %v1250 = vadd.f32 %v497, %v1213
    %v1251 = vadd.f32 %v428, %v1144
    %v1252 = vadd.f32 %v430, %v1146
    %v1253 = vadd.f32 %v501, %v1217
    %v1254 = vadd.f32 %v503, %v1219
    %v1255 = vadd.f32 %v432, %v1148
    %v1256 = vadd.f32 %v434, %v1150
    %v1257 = vadd.f32 %v505, %v1221
    %v1258 = vadd.f32 %v507, %v1223
    %v1259 = vadd.f32 %v438, %v1154
    %v1260 = vadd.f32 %v440, %v1156
    %v1261 = vadd.f32 %v511, %v1227
    %v1262 = vadd.f32 %v513, %v1229
    %v1263 = vadd.f32 %v442, %v1158
    %v1264 = vadd.f32 %v444, %v1160
    %v1265 = vadd.f32 %v515, %v1231
    %v1266 = vadd.f32 %v517, %v1233
    %v1267 = vpack.c.bf16 %v1239, %v1235
    %v1268 = vpack.c.bf16 %v1240, %v1236
    %v1269 = vpack.c.bf16 %v1241, %v1237
    %v1270 = vpack.c.bf16 %v1242, %v1238
    %v1271 = vpack.c.bf16 %v1247, %v1243
    %v1272 = vpack.c.bf16 %v1248, %v1244
    %v1273 = vpack.c.bf16 %v1249, %v1245
    %v1274 = vpack.c.bf16 %v1250, %v1246
    %v1275 = vpack.c.bf16 %v1255, %v1251
    %v1276 = vpack.c.bf16 %v1256, %v1252
    %v1277 = vpack.c.bf16 %v1257, %v1253
    %v1278 = vpack.c.bf16 %v1258, %v1254
    %v1279 = vpack.c.bf16 %v1263, %v1259
    %v1280 = vpack.c.bf16 %v1264, %v1260
    %v1281 = vpack.c.bf16 %v1265, %v1261
    %v1282 = vpack.c.bf16 %v1266, %v1262
    %v1283 = vmul.bf16 %v1267, 1056980736
    %v1284 = vmul.bf16 %v1271, 1056980736
    %v1285 = vmul.bf16 %v1275, 1056980736
    %v1286 = vmul.bf16 %v1279, 1056980736
    %v1287 = vtanh.bf16.pop %v1283
    %v1288 = vtanh.bf16.pop %v1284
    %v1289 = vtanh.bf16.pop %v1285
    %v1290 = vtanh.bf16.pop %v1286
    %v1291 = vadd.bf16 %v1287, 1065369472
    %v1292 = vadd.bf16 %v1288, 1065369472
    %v1293 = vadd.bf16 %v1289, 1065369472
    %v1294 = vadd.bf16 %v1290, 1065369472
    %v1295 = vmul.bf16 %v1291, 1056980736
    %v1296 = vmul.bf16 %v1292, 1056980736
    %v1297 = vmul.bf16 %v1293, 1056980736
    %v1298 = vmul.bf16 %v1294, 1056980736
    %v1299 = vmul.bf16 %v1268, 1056980736
    %v1300 = vmul.bf16 %v1272, 1056980736
    %v1301 = vmul.bf16 %v1276, 1056980736
    %v1302 = vmul.bf16 %v1280, 1056980736
    %v1303 = vtanh.bf16.pop %v1299
    %v1304 = vtanh.bf16.pop %v1300
    %v1305 = vtanh.bf16.pop %v1301
    %v1306 = vtanh.bf16.pop %v1302
    %v1307 = vadd.bf16 %v1303, 1065369472
    %v1308 = vadd.bf16 %v1304, 1065369472
    %v1309 = vadd.bf16 %v1305, 1065369472
    %v1310 = vadd.bf16 %v1306, 1065369472
    %v1311 = vmul.bf16 %v1307, 1056980736
    %v1312 = vmul.bf16 %v1308, 1056980736
    %v1313 = vmul.bf16 %v1309, 1056980736
    %v1314 = vmul.bf16 %v1310, 1056980736
    %v1315 = vtanh.bf16.pop %v1269
    %v1316 = vtanh.bf16.pop %v1273
    %v1317 = vtanh.bf16.pop %v1277
    %v1318 = vtanh.bf16.pop %v1281
    %v1319 = vmul.bf16 %v1270, 1056980736
    %v1320 = vmul.bf16 %v1274, 1056980736
    %v1321 = vmul.bf16 %v1278, 1056980736
    %v1322 = vmul.bf16 %v1282, 1056980736
    %v1323 = vtanh.bf16.pop %v1319
    %v1324 = vtanh.bf16.pop %v1320
    %v1325 = vtanh.bf16.pop %v1321
    %v1326 = vtanh.bf16.pop %v1322
    %v1327 = vadd.bf16 %v1323, 1065369472
    %v1328 = vadd.bf16 %v1324, 1065369472
    %v1329 = vadd.bf16 %v1325, 1065369472
    %v1330 = vadd.bf16 %v1326, 1065369472
    %v1331 = vmul.bf16 %v1327, 1056980736
    %v1332 = vmul.bf16 %v1328, 1056980736
    %v1333 = vmul.bf16 %v1329, 1056980736
    %v1334 = vmul.bf16 %v1330, 1056980736
    %v1335 = vunpack.c.l.bf16 %v1311
    %v1336 = vunpack.c.h.bf16 %v1311
    %v1337 = vunpack.c.l.bf16 %v1312
    %v1338 = vunpack.c.h.bf16 %v1312
    %v1339 = vunpack.c.l.bf16 %v1313
    %v1340 = vunpack.c.h.bf16 %v1313
    %v1341 = vunpack.c.l.bf16 %v1314
    %v1342 = vunpack.c.h.bf16 %v1314
    %v1343 = vmul.f32 %v1335, %v1069
    %v1344 = vmul.f32 %v1336, %v1070
    %v1345 = vmul.f32 %v1337, %v1071
    %v1346 = vmul.f32 %v1338, %v1072
    %v1347 = vmul.f32 %v1339, %v1073
    %v1348 = vmul.f32 %v1340, %v1074
    %v1349 = vmul.f32 %v1341, %v1075
    %v1350 = vmul.f32 %v1342, %v1076
    %v1351 = vmul.bf16 %v1295, %v1315
    %v1352 = vmul.bf16 %v1296, %v1316
    %v1353 = vmul.bf16 %v1297, %v1317
    %v1354 = vmul.bf16 %v1298, %v1318
    %v1355 = vunpack.c.l.bf16 %v1351
    %v1356 = vunpack.c.h.bf16 %v1351
    %v1357 = vunpack.c.l.bf16 %v1352
    %v1358 = vunpack.c.h.bf16 %v1352
    %v1359 = vunpack.c.l.bf16 %v1353
    %v1360 = vunpack.c.h.bf16 %v1353
    %v1361 = vunpack.c.l.bf16 %v1354
    %v1362 = vunpack.c.h.bf16 %v1354
    %v1363 = vadd.f32 %v1343, %v1355
    %v1364 = vadd.f32 %v1344, %v1356
    %v1365 = vadd.f32 %v1345, %v1357
    %v1366 = vadd.f32 %v1346, %v1358
    %v1367 = vadd.f32 %v1347, %v1359
    %v1368 = vadd.f32 %v1348, %v1360
    %v1369 = vadd.f32 %v1349, %v1361
    %v1370 = vadd.f32 %v1350, %v1362
    %v1371 = vpack.c.bf16 %v1364, %v1363
    %v1372 = vpack.c.bf16 %v1366, %v1365
    %v1373 = vpack.c.bf16 %v1368, %v1367
    %v1374 = vpack.c.bf16 %v1370, %v1369
    %v1375 = vtanh.bf16.pop %v1371
    %v1376 = vtanh.bf16.pop %v1372
    %v1377 = vtanh.bf16.pop %v1373
    %v1378 = vtanh.bf16.pop %v1374
    %v1379 = vmul.bf16 %v1331, %v1375
    %v1380 = vmul.bf16 %v1332, %v1376
    %v1381 = vmul.bf16 %v1333, %v1377
    %v1382 = vmul.bf16 %v1334, %v1378
    %1383 = vmatprep.subr.bf16.mxu0 %v760
    %1384 = vmatpush1.bf16.msra.mxu0 %v759
    %1385 = vmatprep.subr.bf16.mxu0 %v756
    %1386 = vmatpush1.bf16.msra.mxu0 %v755
    %1387 = vmatprep.subr.bf16.mxu0 %v752
    %1388 = vmatpush1.bf16.msra.mxu0 %v751
    %1389 = vmatprep.subr.bf16.mxu0 %v748
    %1390 = vmatpush1.bf16.msra.mxu0 %v747
    %1391 = vmatprep.subr.bf16.mxu0 %v744
    %1392 = vmatpush1.bf16.msra.mxu0 %v743
    %1393 = vmatprep.subr.bf16.mxu0 %v740
    %1394 = vmatpush1.bf16.msra.mxu0 %v739
    %1395 = vmatprep.subr.bf16.mxu0 %v736
    %1396 = vmatpush1.bf16.msra.mxu0 %v735
    %1397 = vmatprep.subr.bf16.mxu0 %v732
    %1398 = vmatpush1.bf16.msra.mxu0 %v731
    %1399 = vmatprep.subr.bf16.mxu0 0
    %1400 = vmatpush2.bf16.msra.mxu0 0
    %1401 = vmatprep.subr.bf16.mxu0 0
    %1402 = vmatpush2.bf16.msra.mxu0 0
    %1403 = vmatprep.subr.bf16.mxu0 0
    %1404 = vmatpush2.bf16.msra.mxu0 0
    %1405 = vmatprep.subr.bf16.mxu0 0
    %1406 = vmatpush2.bf16.msra.mxu0 0
    %1407 = vmatprep.subr.bf16.mxu0 0
    %1408 = vmatpush2.bf16.msra.mxu0 0
    %1409 = vmatprep.subr.bf16.mxu0 0
    %1410 = vmatpush2.bf16.msra.mxu0 0
    %1411 = vmatprep.subr.bf16.mxu0 0
    %1412 = vmatpush2.bf16.msra.mxu0 0
    %1413 = vmatprep.subr.bf16.mxu0 0
    %1414 = vmatpush2.bf16.msra.mxu0 0
    %1415 = vmatprep.mubr.bf16.mxu0 0
    %1416 = vmatmul.mubr.bf16.gmra.mxu0 %v1379
    %v1417 = vpop.f32.mrf.mxu0
    %v1418 = vadd.f32 0.0, %v1417
    %v1419 = vpop.f32.mrf.mxu0
    %v1420 = vadd.f32 0.0, %v1419
    %v1421 = vpop.f32.mrf.mxu0
    %v1422 = vadd.f32 0.0, %v1421
    %v1423 = vpop.f32.mrf.mxu0
    %v1424 = vadd.f32 0.0, %v1423
    %1425 = vmatprep.mubr.bf16.mxu0 0
    %1426 = vmatmul.mubr.bf16.gmra.mxu0 %v1380
    %v1427 = vpop.f32.mrf.mxu0
    %v1428 = vadd.f32 0.0, %v1427
    %v1429 = vpop.f32.mrf.mxu0
    %v1430 = vadd.f32 0.0, %v1429
    %v1431 = vpop.f32.mrf.mxu0
    %v1432 = vadd.f32 0.0, %v1431
    %v1433 = vpop.f32.mrf.mxu0
    %v1434 = vadd.f32 0.0, %v1433
    %1435 = vmatprep.mubr.bf16.mxu0 0
    %1436 = vmatmul.mubr.bf16.gmra.mxu0 %v1381
    %v1437 = vpop.f32.mrf.mxu0
    %v1438 = vadd.f32 0.0, %v1437
    %v1439 = vpop.f32.mrf.mxu0
    %v1440 = vadd.f32 0.0, %v1439
    %v1441 = vpop.f32.mrf.mxu0
    %v1442 = vadd.f32 0.0, %v1441
    %v1443 = vpop.f32.mrf.mxu0
    %v1444 = vadd.f32 0.0, %v1443
    %1445 = vmatprep.mubr.bf16.mxu0 0
    %1446 = vmatmul.mubr.bf16.gmra.mxu0 %v1382
    %v1447 = vpop.f32.mrf.mxu0
    %v1448 = vadd.f32 0.0, %v1447
    %v1449 = vpop.f32.mrf.mxu0
    %v1450 = vadd.f32 0.0, %v1449
    %v1451 = vpop.f32.mrf.mxu0
    %v1452 = vadd.f32 0.0, %v1451
    %v1453 = vpop.f32.mrf.mxu0
    %v1454 = vadd.f32 0.0, %v1453
    %1455 = vdwg.mxu0
    %1456 = vmatprep.subr.bf16.mxu0 %v762
    %1457 = vmatpush1.bf16.msra.mxu0 %v761
    %1458 = vmatprep.subr.bf16.mxu0 %v758
    %1459 = vmatpush1.bf16.msra.mxu0 %v757
    %1460 = vmatprep.subr.bf16.mxu0 %v754
    %1461 = vmatpush1.bf16.msra.mxu0 %v753
    %1462 = vmatprep.subr.bf16.mxu0 %v750
    %1463 = vmatpush1.bf16.msra.mxu0 %v749
    %1464 = vmatprep.subr.bf16.mxu0 %v746
    %1465 = vmatpush1.bf16.msra.mxu0 %v745
    %1466 = vmatprep.subr.bf16.mxu0 %v742
    %1467 = vmatpush1.bf16.msra.mxu0 %v741
    %1468 = vmatprep.subr.bf16.mxu0 %v738
    %1469 = vmatpush1.bf16.msra.mxu0 %v737
    %1470 = vmatprep.subr.bf16.mxu0 %v734
    %1471 = vmatpush1.bf16.msra.mxu0 %v733
    %1472 = vmatprep.subr.bf16.mxu0 0
    %1473 = vmatpush2.bf16.msra.mxu0 0
    %1474 = vmatprep.subr.bf16.mxu0 0
    %1475 = vmatpush2.bf16.msra.mxu0 0
    %1476 = vmatprep.subr.bf16.mxu0 0
    %1477 = vmatpush2.bf16.msra.mxu0 0
    %1478 = vmatprep.subr.bf16.mxu0 0
    %1479 = vmatpush2.bf16.msra.mxu0 0
    %1480 = vmatprep.subr.bf16.mxu0 0
    %1481 = vmatpush2.bf16.msra.mxu0 0
    %1482 = vmatprep.subr.bf16.mxu0 0
    %1483 = vmatpush2.bf16.msra.mxu0 0
    %1484 = vmatprep.subr.bf16.mxu0 0
    %1485 = vmatpush2.bf16.msra.mxu0 0
    %1486 = vmatprep.subr.bf16.mxu0 0
    %1487 = vmatpush2.bf16.msra.mxu0 0
    %1488 = vmatprep.mubr.bf16.mxu0 0
    %1489 = vmatmul.mubr.bf16.gmra.mxu0 %v1379
    %v1490 = vpop.f32.mrf.mxu0
    %v1491 = vadd.f32 0.0, %v1490
    %v1492 = vpop.f32.mrf.mxu0
    %v1493 = vadd.f32 0.0, %v1492
    %v1494 = vpop.f32.mrf.mxu0
    %v1495 = vadd.f32 0.0, %v1494
    %v1496 = vpop.f32.mrf.mxu0
    %v1497 = vadd.f32 0.0, %v1496
    %1498 = vmatprep.mubr.bf16.mxu0 0
    %1499 = vmatmul.mubr.bf16.gmra.mxu0 %v1380
    %v1500 = vpop.f32.mrf.mxu0
    %v1501 = vadd.f32 0.0, %v1500
    %v1502 = vpop.f32.mrf.mxu0
    %v1503 = vadd.f32 0.0, %v1502
    %v1504 = vpop.f32.mrf.mxu0
    %v1505 = vadd.f32 0.0, %v1504
    %v1506 = vpop.f32.mrf.mxu0
    %v1507 = vadd.f32 0.0, %v1506
    %1508 = vmatprep.mubr.bf16.mxu0 0
    %1509 = vmatmul.mubr.bf16.gmra.mxu0 %v1381
    %v1510 = vpop.f32.mrf.mxu0
    %v1511 = vadd.f32 0.0, %v1510
    %v1512 = vpop.f32.mrf.mxu0
    %v1513 = vadd.f32 0.0, %v1512
    %v1514 = vpop.f32.mrf.mxu0
    %v1515 = vadd.f32 0.0, %v1514
    %v1516 = vpop.f32.mrf.mxu0
    %v1517 = vadd.f32 0.0, %v1516
    %1518 = vmatprep.mubr.bf16.mxu0 0
    %1519 = vmatmul.mubr.bf16.gmra.mxu0 %v1382
    %v1520 = vpop.f32.mrf.mxu0
    %v1521 = vadd.f32 0.0, %v1520
    %v1522 = vpop.f32.mrf.mxu0
    %v1523 = vadd.f32 0.0, %v1522
    %v1524 = vpop.f32.mrf.mxu0
    %v1525 = vadd.f32 0.0, %v1524
    %v1526 = vpop.f32.mrf.mxu0
    %v1527 = vadd.f32 0.0, %v1526
    %1528 = vdwg.mxu0
    %v1529 = vadd.f32 %v408, %v1418
    %v1530 = vadd.f32 %v410, %v1420
    %v1531 = vadd.f32 %v481, %v1491
    %v1532 = vadd.f32 %v483, %v1493
    %v1533 = vadd.f32 %v412, %v1422
    %v1534 = vadd.f32 %v414, %v1424
    %v1535 = vadd.f32 %v485, %v1495
    %v1536 = vadd.f32 %v487, %v1497
    %v1537 = vadd.f32 %v418, %v1428
    %v1538 = vadd.f32 %v420, %v1430
    %v1539 = vadd.f32 %v491, %v1501
    %v1540 = vadd.f32 %v493, %v1503
    %v1541 = vadd.f32 %v422, %v1432
    %v1542 = vadd.f32 %v424, %v1434
    %v1543 = vadd.f32 %v495, %v1505
    %v1544 = vadd.f32 %v497, %v1507
    %v1545 = vadd.f32 %v428, %v1438
    %v1546 = vadd.f32 %v430, %v1440
    %v1547 = vadd.f32 %v501, %v1511
    %v1548 = vadd.f32 %v503, %v1513
    %v1549 = vadd.f32 %v432, %v1442
    %v1550 = vadd.f32 %v434, %v1444
    %v1551 = vadd.f32 %v505, %v1515
    %v1552 = vadd.f32 %v507, %v1517
    %v1553 = vadd.f32 %v438, %v1448
    %v1554 = vadd.f32 %v440, %v1450
    %v1555 = vadd.f32 %v511, %v1521
    %v1556 = vadd.f32 %v513, %v1523
    %v1557 = vadd.f32 %v442, %v1452
    %v1558 = vadd.f32 %v444, %v1454
    %v1559 = vadd.f32 %v515, %v1525
    %v1560 = vadd.f32 %v517, %v1527
    %v1561 = vpack.c.bf16 %v1533, %v1529
    %v1562 = vpack.c.bf16 %v1534, %v1530
    %v1563 = vpack.c.bf16 %v1535, %v1531
    %v1564 = vpack.c.bf16 %v1536, %v1532
    %v1565 = vpack.c.bf16 %v1541, %v1537
    %v1566 = vpack.c.bf16 %v1542, %v1538
    %v1567 = vpack.c.bf16 %v1543, %v1539
    %v1568 = vpack.c.bf16 %v1544, %v1540
    %v1569 = vpack.c.bf16 %v1549, %v1545
    %v1570 = vpack.c.bf16 %v1550, %v1546
    %v1571 = vpack.c.bf16 %v1551, %v1547
    %v1572 = vpack.c.bf16 %v1552, %v1548
    %v1573 = vpack.c.bf16 %v1557, %v1553
    %v1574 = vpack.c.bf16 %v1558, %v1554
    %v1575 = vpack.c.bf16 %v1559, %v1555
    %v1576 = vpack.c.bf16 %v1560, %v1556
    %v1577 = vmul.bf16 %v1561, 1056980736
    %v1578 = vmul.bf16 %v1565, 1056980736
    %v1579 = vmul.bf16 %v1569, 1056980736
    %v1580 = vmul.bf16 %v1573, 1056980736
    %v1581 = vtanh.bf16.pop %v1577
    %v1582 = vtanh.bf16.pop %v1578
    %v1583 = vtanh.bf16.pop %v1579
    %v1584 = vtanh.bf16.pop %v1580
    %v1585 = vadd.bf16 %v1581, 1065369472
    %v1586 = vadd.bf16 %v1582, 1065369472
    %v1587 = vadd.bf16 %v1583, 1065369472
    %v1588 = vadd.bf16 %v1584, 1065369472
    %v1589 = vmul.bf16 %v1585, 1056980736
    %v1590 = vmul.bf16 %v1586, 1056980736
    %v1591 = vmul.bf16 %v1587, 1056980736
    %v1592 = vmul.bf16 %v1588, 1056980736
    %v1593 = vmul.bf16 %v1562, 1056980736
    %v1594 = vmul.bf16 %v1566, 1056980736
    %v1595 = vmul.bf16 %v1570, 1056980736
    %v1596 = vmul.bf16 %v1574, 1056980736
    %v1597 = vtanh.bf16.pop %v1593
    %v1598 = vtanh.bf16.pop %v1594
    %v1599 = vtanh.bf16.pop %v1595
    %v1600 = vtanh.bf16.pop %v1596
    %v1601 = vadd.bf16 %v1597, 1065369472
    %v1602 = vadd.bf16 %v1598, 1065369472
    %v1603 = vadd.bf16 %v1599, 1065369472
    %v1604 = vadd.bf16 %v1600, 1065369472
    %v1605 = vmul.bf16 %v1601, 1056980736
    %v1606 = vmul.bf16 %v1602, 1056980736
    %v1607 = vmul.bf16 %v1603, 1056980736
    %v1608 = vmul.bf16 %v1604, 1056980736
    %v1609 = vtanh.bf16.pop %v1563
    %v1610 = vtanh.bf16.pop %v1567
    %v1611 = vtanh.bf16.pop %v1571
    %v1612 = vtanh.bf16.pop %v1575
    %v1613 = vmul.bf16 %v1564, 1056980736
    %v1614 = vmul.bf16 %v1568, 1056980736
    %v1615 = vmul.bf16 %v1572, 1056980736
    %v1616 = vmul.bf16 %v1576, 1056980736
    %v1617 = vtanh.bf16.pop %v1613
    %v1618 = vtanh.bf16.pop %v1614
    %v1619 = vtanh.bf16.pop %v1615
    %v1620 = vtanh.bf16.pop %v1616
    %v1621 = vadd.bf16 %v1617, 1065369472
    %v1622 = vadd.bf16 %v1618, 1065369472
    %v1623 = vadd.bf16 %v1619, 1065369472
    %v1624 = vadd.bf16 %v1620, 1065369472
    %v1625 = vmul.bf16 %v1621, 1056980736
    %v1626 = vmul.bf16 %v1622, 1056980736
    %v1627 = vmul.bf16 %v1623, 1056980736
    %v1628 = vmul.bf16 %v1624, 1056980736
    %v1629 = vunpack.c.l.bf16 %v1605
    %v1630 = vunpack.c.h.bf16 %v1605
    %v1631 = vunpack.c.l.bf16 %v1606
    %v1632 = vunpack.c.h.bf16 %v1606
    %v1633 = vunpack.c.l.bf16 %v1607
    %v1634 = vunpack.c.h.bf16 %v1607
    %v1635 = vunpack.c.l.bf16 %v1608
    %v1636 = vunpack.c.h.bf16 %v1608
    %v1637 = vmul.f32 %v1629, %v1363
    %v1638 = vmul.f32 %v1630, %v1364
    %v1639 = vmul.f32 %v1631, %v1365
    %v1640 = vmul.f32 %v1632, %v1366
    %v1641 = vmul.f32 %v1633, %v1367
    %v1642 = vmul.f32 %v1634, %v1368
    %v1643 = vmul.f32 %v1635, %v1369
    %v1644 = vmul.f32 %v1636, %v1370
    %v1645 = vmul.bf16 %v1589, %v1609
    %v1646 = vmul.bf16 %v1590, %v1610
    %v1647 = vmul.bf16 %v1591, %v1611
    %v1648 = vmul.bf16 %v1592, %v1612
    %v1649 = vunpack.c.l.bf16 %v1645
    %v1650 = vunpack.c.h.bf16 %v1645
    %v1651 = vunpack.c.l.bf16 %v1646
    %v1652 = vunpack.c.h.bf16 %v1646
    %v1653 = vunpack.c.l.bf16 %v1647
    %v1654 = vunpack.c.h.bf16 %v1647
    %v1655 = vunpack.c.l.bf16 %v1648
    %v1656 = vunpack.c.h.bf16 %v1648
    %v1657 = vadd.f32 %v1637, %v1649
    %v1658 = vadd.f32 %v1638, %v1650
    %v1659 = vadd.f32 %v1639, %v1651
    %v1660 = vadd.f32 %v1640, %v1652
    %v1661 = vadd.f32 %v1641, %v1653
    %v1662 = vadd.f32 %v1642, %v1654
    %v1663 = vadd.f32 %v1643, %v1655
    %v1664 = vadd.f32 %v1644, %v1656
    %v1665 = vpack.c.bf16 %v1658, %v1657
    %v1666 = vpack.c.bf16 %v1660, %v1659
    %v1667 = vpack.c.bf16 %v1662, %v1661
    %v1668 = vpack.c.bf16 %v1664, %v1663
    %v1669 = vtanh.bf16.pop %v1665
    %v1670 = vtanh.bf16.pop %v1666
    %v1671 = vtanh.bf16.pop %v1667
    %v1672 = vtanh.bf16.pop %v1668
    %v1673 = vmul.bf16 %v1625, %v1669
    %v1674 = vmul.bf16 %v1626, %v1670
    %v1675 = vmul.bf16 %v1627, %v1671
    %v1676 = vmul.bf16 %v1628, %v1672
    %v1678 = vlaneseq
    %v1679 = vshrl.u32 %v1678, 7
    %v1680 = vsub.s32 0, %v1679
    %v1681 = vrot.slane %v187, %v1680
    %v1715 = vunpack.c.l.b16 %v154
    %v1716 = vunpack.c.l.b16 %v155
    %v1717 = vunpack.c.l.b16 %v156
    %v1718 = vunpack.c.l.b16 %v157
    %v1719 = vunpack.c.l.b16 %v158
    %v1720 = vunpack.c.l.b16 %v159
    %v1721 = vunpack.c.l.b16 %v160
    %v1722 = vunpack.c.l.b16 %v161
    %v1723 = vunpack.c.l.b16 %v162
    %v1724 = vunpack.c.l.b16 %v163
    %v1725 = vunpack.c.l.b16 %v164
    %v1726 = vunpack.c.l.b16 %v165
    %v1727 = vunpack.c.l.b16 %v166
    %v1728 = vunpack.c.l.b16 %v167
    %v1729 = vunpack.c.l.b16 %v168
    %v1730 = vunpack.c.l.b16 %v169
    %v1731 = vunpack.c.l.b16 %v170
    %v1732 = vunpack.c.l.b16 %v171
    %v1733 = vunpack.c.l.b16 %v172
    %v1734 = vunpack.c.l.b16 %v173
    %v1735 = vunpack.c.l.b16 %v174
    %v1736 = vunpack.c.l.b16 %v175
    %v1737 = vunpack.c.l.b16 %v176
    %v1738 = vunpack.c.l.b16 %v177
    %v1739 = vunpack.c.l.b16 %v178
    %v1740 = vunpack.c.l.b16 %v179
    %v1741 = vunpack.c.l.b16 %v180
    %v1742 = vunpack.c.l.b16 %v181
    %v1743 = vunpack.c.l.b16 %v182
    %v1744 = vunpack.c.l.b16 %v183
    %v1745 = vunpack.c.l.b16 %v184
    %v1746 = vunpack.c.l.b16 %v185
    %v1747 = vpack.c.b16 %v1716, %v1715
    %v1748 = vpack.c.b16 %v1718, %v1717
    %v1749 = vpack.c.b16 %v1720, %v1719
    %v1750 = vpack.c.b16 %v1722, %v1721
    %v1751 = vpack.c.b16 %v1724, %v1723
    %v1752 = vpack.c.b16 %v1726, %v1725
    %v1753 = vpack.c.b16 %v1728, %v1727
    %v1754 = vpack.c.b16 %v1730, %v1729
    %v1755 = vpack.c.b16 %v1732, %v1731
    %v1756 = vpack.c.b16 %v1734, %v1733
    %v1757 = vpack.c.b16 %v1736, %v1735
    %v1758 = vpack.c.b16 %v1738, %v1737
    %v1759 = vpack.c.b16 %v1740, %v1739
    %v1760 = vpack.c.b16 %v1742, %v1741
    %v1761 = vpack.c.b16 %v1744, %v1743
    %v1762 = vpack.c.b16 %v1746, %v1745
    %1779 = vmatprep.subr.bf16.mxu0 0
    %1780 = vmatpush1.bf16.msra.mxu0 %v1754
    %1781 = vmatprep.subr.bf16.mxu0 0
    %1782 = vmatpush1.bf16.msra.mxu0 %v1753
    %1783 = vmatprep.subr.bf16.mxu0 0
    %1784 = vmatpush1.bf16.msra.mxu0 %v1752
    %1785 = vmatprep.subr.bf16.mxu0 0
    %1786 = vmatpush1.bf16.msra.mxu0 %v1751
    %1787 = vmatprep.subr.bf16.mxu0 0
    %1788 = vmatpush1.bf16.msra.mxu0 %v1750
    %1789 = vmatprep.subr.bf16.mxu0 0
    %1790 = vmatpush1.bf16.msra.mxu0 %v1749
    %1791 = vmatprep.subr.bf16.mxu0 0
    %1792 = vmatpush1.bf16.msra.mxu0 %v1748
    %1793 = vmatprep.subr.bf16.mxu0 0
    %1794 = vmatpush1.bf16.msra.mxu0 %v1747
    %1795 = vmatprep.subr.bf16.mxu0 0
    %1796 = vmatpush2.bf16.msra.mxu0 %v1762
    %1797 = vmatprep.subr.bf16.mxu0 0
    %1798 = vmatpush2.bf16.msra.mxu0 %v1761
    %1799 = vmatprep.subr.bf16.mxu0 0
    %1800 = vmatpush2.bf16.msra.mxu0 %v1760
    %1801 = vmatprep.subr.bf16.mxu0 0
    %1802 = vmatpush2.bf16.msra.mxu0 %v1759
    %1803 = vmatprep.subr.bf16.mxu0 0
    %1804 = vmatpush2.bf16.msra.mxu0 %v1758
    %1805 = vmatprep.subr.bf16.mxu0 0
    %1806 = vmatpush2.bf16.msra.mxu0 %v1757
    %1807 = vmatprep.subr.bf16.mxu0 0
    %1808 = vmatpush2.bf16.msra.mxu0 %v1756
    %1809 = vmatprep.subr.bf16.mxu0 0
    %1810 = vmatpush2.bf16.msra.mxu0 %v1755
    %1811 = vmatprep.mubr.bf16.mxu0 %v1085
    %1812 = vmatmul.mubr.bf16.gmra.mxu0 %v631
    %v1813 = vpop.f32.mrf.mxu0
    %v1814 = vadd.f32 %v1681, %v1813
    %v1815 = vpop.f32.mrf.mxu0
    %v1816 = vpop.f32.mrf.mxu0
    %v1817 = vadd.f32 %v1681, %v1816
    %v1818 = vpop.f32.mrf.mxu0
    %1819 = vmatprep.mubr.bf16.mxu0 %v1086
    %1820 = vmatmul.mubr.bf16.gmra.mxu0 %v632
    %v1821 = vpop.f32.mrf.mxu0
    %v1822 = vadd.f32 %v1681, %v1821
    %v1823 = vpop.f32.mrf.mxu0
    %v1824 = vpop.f32.mrf.mxu0
    %v1825 = vadd.f32 %v1681, %v1824
    %v1826 = vpop.f32.mrf.mxu0
    %1827 = vmatprep.mubr.bf16.mxu0 %v1087
    %1828 = vmatmul.mubr.bf16.gmra.mxu0 %v633
    %v1829 = vpop.f32.mrf.mxu0
    %v1830 = vadd.f32 %v1681, %v1829
    %v1831 = vpop.f32.mrf.mxu0
    %v1832 = vpop.f32.mrf.mxu0
    %v1833 = vadd.f32 %v1681, %v1832
    %v1834 = vpop.f32.mrf.mxu0
    %1835 = vmatprep.mubr.bf16.mxu0 %v1088
    %1836 = vmatmul.mubr.bf16.gmra.mxu0 %v634
    %v1837 = vpop.f32.mrf.mxu0
    %v1838 = vadd.f32 %v1681, %v1837
    %v1839 = vpop.f32.mrf.mxu0
    %v1840 = vpop.f32.mrf.mxu0
    %v1841 = vadd.f32 %v1681, %v1840
    %v1842 = vpop.f32.mrf.mxu0
    %1843 = vdwg.mxu0
    %v1844 = vpack.c.bf16 %v1817, %v1814
    %v1845 = vpack.c.bf16 %v1825, %v1822
    %v1846 = vpack.c.bf16 %v1833, %v1830
    %v1847 = vpack.c.bf16 %v1841, %v1838
    %v1852 = vunpack.c.l.b16 %v1844
    %v1853 = vunpack.c.h.b16 %v1844
    %v1854 = vunpack.c.l.b16 %v1845
    %v1855 = vunpack.c.h.b16 %v1845
    %v1856 = vunpack.c.l.b16 %v1846
    %v1857 = vunpack.c.h.b16 %v1846
    %v1858 = vunpack.c.l.b16 %v1847
    %v1859 = vunpack.c.h.b16 %v1847
    %v1860 = vpack.c.b16 %v1852, %v1852
    %v1861 = vpack.c.b16 %v1853, %v1853
    %v1862 = vpack.c.b16 %v1854, %v1854
    %v1863 = vpack.c.b16 %v1855, %v1855
    %v1864 = vpack.c.b16 %v1856, %v1856
    %v1865 = vpack.c.b16 %v1857, %v1857
    %v1866 = vpack.c.b16 %v1858, %v1858
    %v1867 = vpack.c.b16 %v1859, %v1859
    %1876 = vst [vmem:[#allocation10] sm:$0xf] %v1860
    %1877 = vst [vmem:[#allocation10 + $0x8] sm:$0xf] %v1861
    %1878 = vst [vmem:[#allocation10 + $0x10] sm:$0xf] %v1862
    %1879 = vst [vmem:[#allocation10 + $0x18] sm:$0xf] %v1863
    %1880 = vst [vmem:[#allocation10 + $0x20] sm:$0xf] %v1864
    %1881 = vst [vmem:[#allocation10 + $0x28] sm:$0xf] %v1865
    %1882 = vst [vmem:[#allocation10 + $0x30] sm:$0xf] %v1866
    %1883 = vst [vmem:[#allocation10 + $0x38] sm:$0xf] %v1867
    %1884 = vmatprep.subr.bf16.mxu0 0
    %1885 = vmatpush1.bf16.msra.mxu0 %v1754
    %1886 = vmatprep.subr.bf16.mxu0 0
    %1887 = vmatpush1.bf16.msra.mxu0 %v1753
    %1888 = vmatprep.subr.bf16.mxu0 0
    %1889 = vmatpush1.bf16.msra.mxu0 %v1752
    %1890 = vmatprep.subr.bf16.mxu0 0
    %1891 = vmatpush1.bf16.msra.mxu0 %v1751
    %1892 = vmatprep.subr.bf16.mxu0 0
    %1893 = vmatpush1.bf16.msra.mxu0 %v1750
    %1894 = vmatprep.subr.bf16.mxu0 0
    %1895 = vmatpush1.bf16.msra.mxu0 %v1749
    %1896 = vmatprep.subr.bf16.mxu0 0
    %1897 = vmatpush1.bf16.msra.mxu0 %v1748
    %1898 = vmatprep.subr.bf16.mxu0 0
    %1899 = vmatpush1.bf16.msra.mxu0 %v1747
    %1900 = vmatprep.subr.bf16.mxu0 0
    %1901 = vmatpush2.bf16.msra.mxu0 %v1762
    %1902 = vmatprep.subr.bf16.mxu0 0
    %1903 = vmatpush2.bf16.msra.mxu0 %v1761
    %1904 = vmatprep.subr.bf16.mxu0 0
    %1905 = vmatpush2.bf16.msra.mxu0 %v1760
    %1906 = vmatprep.subr.bf16.mxu0 0
    %1907 = vmatpush2.bf16.msra.mxu0 %v1759
    %1908 = vmatprep.subr.bf16.mxu0 0
    %1909 = vmatpush2.bf16.msra.mxu0 %v1758
    %1910 = vmatprep.subr.bf16.mxu0 0
    %1911 = vmatpush2.bf16.msra.mxu0 %v1757
    %1912 = vmatprep.subr.bf16.mxu0 0
    %1913 = vmatpush2.bf16.msra.mxu0 %v1756
    %1914 = vmatprep.subr.bf16.mxu0 0
    %1915 = vmatpush2.bf16.msra.mxu0 %v1755
    %1916 = vmatprep.mubr.bf16.mxu0 %v1673
    %1917 = vmatmul.mubr.bf16.gmra.mxu0 %v1379
    %v1918 = vpop.f32.mrf.mxu0
    %v1919 = vadd.f32 %v1681, %v1918
    %v1920 = vpop.f32.mrf.mxu0
    %v1921 = vpop.f32.mrf.mxu0
    %v1922 = vadd.f32 %v1681, %v1921
    %v1923 = vpop.f32.mrf.mxu0
    %1924 = vmatprep.mubr.bf16.mxu0 %v1674
    %1925 = vmatmul.mubr.bf16.gmra.mxu0 %v1380
    %v1926 = vpop.f32.mrf.mxu0
    %v1927 = vadd.f32 %v1681, %v1926
    %v1928 = vpop.f32.mrf.mxu0
    %v1929 = vpop.f32.mrf.mxu0
    %v1930 = vadd.f32 %v1681, %v1929
    %v1931 = vpop.f32.mrf.mxu0
    %1932 = vmatprep.mubr.bf16.mxu0 %v1675
    %1933 = vmatmul.mubr.bf16.gmra.mxu0 %v1381
    %v1934 = vpop.f32.mrf.mxu0
    %v1935 = vadd.f32 %v1681, %v1934
    %v1936 = vpop.f32.mrf.mxu0
    %v1937 = vpop.f32.mrf.mxu0
    %v1938 = vadd.f32 %v1681, %v1937
    %v1939 = vpop.f32.mrf.mxu0
    %1940 = vmatprep.mubr.bf16.mxu0 %v1676
    %1941 = vmatmul.mubr.bf16.gmra.mxu0 %v1382
    %v1942 = vpop.f32.mrf.mxu0
    %v1943 = vadd.f32 %v1681, %v1942
    %v1944 = vpop.f32.mrf.mxu0
    %v1945 = vpop.f32.mrf.mxu0
    %v1946 = vadd.f32 %v1681, %v1945
    %v1947 = vpop.f32.mrf.mxu0
    %1948 = vdwg.mxu0
    %v1949 = vpack.c.bf16 %v1922, %v1919
    %v1950 = vpack.c.bf16 %v1930, %v1927
    %v1951 = vpack.c.bf16 %v1938, %v1935
    %v1952 = vpack.c.bf16 %v1946, %v1943
    %v1957 = vunpack.c.l.b16 %v1949
    %v1958 = vunpack.c.h.b16 %v1949
    %v1959 = vunpack.c.l.b16 %v1950
    %v1960 = vunpack.c.h.b16 %v1950
    %v1961 = vunpack.c.l.b16 %v1951
    %v1962 = vunpack.c.h.b16 %v1951
    %v1963 = vunpack.c.l.b16 %v1952
    %v1964 = vunpack.c.h.b16 %v1952
    %v1965 = vpack.c.b16 %v1957, %v1957
    %v1966 = vpack.c.b16 %v1958, %v1958
    %v1967 = vpack.c.b16 %v1959, %v1959
    %v1968 = vpack.c.b16 %v1960, %v1960
    %v1969 = vpack.c.b16 %v1961, %v1961
    %v1970 = vpack.c.b16 %v1962, %v1962
    %v1971 = vpack.c.b16 %v1963, %v1963
    %v1972 = vpack.c.b16 %v1964, %v1964
    %1981 = vst [vmem:[#allocation10 + $0x4] sm:$0xf] %v1965
    %1982 = vst [vmem:[#allocation10 + $0xc] sm:$0xf] %v1966
    %1983 = vst [vmem:[#allocation10 + $0x14] sm:$0xf] %v1967
    %1984 = vst [vmem:[#allocation10 + $0x1c] sm:$0xf] %v1968
    %1985 = vst [vmem:[#allocation10 + $0x24] sm:$0xf] %v1969
    %1986 = vst [vmem:[#allocation10 + $0x2c] sm:$0xf] %v1970
    %1987 = vst [vmem:[#allocation10 + $0x34] sm:$0xf] %v1971
    %1988 = vst [vmem:[#allocation10 + $0x3c] sm:$0xf] %v1972
    // Predicated region
    $region42: #{tpu_custom_call.1} parent=1 // pred_check
      _
    $region43: #{tpu_custom_call.1} parent=1 // pred_check_branch
      %1990 = sbr.rel (0) target = $region45
    $region44: #{tpu_custom_call.1} parent=1 // pred_region
      %s1992 = ssub.s32 1024, 1024
      %1993 = vsyncadd [#allocation4], %s1992
      %s1994 = sshll.u32 [#allocation10], 4
      %s1995 = int_to_ptr.vmem [resolvable:$true] %s1994
      %2000 = dma.vmem_to_hbm [thread:$0]  %s1995, 1024, %s6, [#allocation4], 128, 128, 8
    $region45: #{tpu_custom_call.1} parent=1 // pred_fallthru
      _
    // Predicated region
    $region46: #{tpu_custom_call.1} parent=1 // pred_check
      _
    $region47: #{tpu_custom_call.1} parent=1 // pred_check_branch
      %2002 = sbr.rel (0) target = $region49
    $region48: #{tpu_custom_call.1} parent=1 // pred_region
      %2003 = dma.done [#allocation4], 1024
    $region49: #{tpu_custom_call.1} parent=1 // pred_fallthru
      _
    %2004 = vsyncpa [#allocation3], 1
    %2005 = vsyncpa [#allocation6], 1
    %2006 = vsyncpa [#allocation9], 1
    %2007 = vsyncpa [#allocation4], 1

</llo_original>
